<compile_context>
chip_gen: v7x
topology: tpu7x:2x2x1
jax: 0.10.0
libtpu: 0.0.40
codegen_flags: <defaults>
</compile_context>

<pallas_src>
import functools

import jax
import jax.numpy as jnp
from jax.experimental import pallas as pl
from jax.experimental.pallas import tpu as pltpu


def _upconv_kernel(x_ref, w_ref, b_ref, y_ref, stats_ref):
    """Transposed conv (k=3, stride=2, pad=1, out_pad=1) for one row tile.

    x_ref:     (1, 1, TH+1, W+1, Cin)  bf16  row tile + 1-row/1-col zero halo
    w_ref:     (4, Cin, 4*Cout)        bf16  per-tap, phase-packed weights
    b_ref:     (1, 4*Cout)             f32   bias tiled over the 4 phases
    y_ref:     (1, 1, TH*W, 4*Cout)    f32   pre-BN activations (phase-major)
    stats_ref: (1, 1, 2, 4*Cout)       f32   row0 = sum, row1 = sum of squares
    """
    xt = x_ref[0, 0]                                     # (TH+1, W+1, Cin) bf16
    th = xt.shape[0] - 1
    w = xt.shape[1] - 1
    cin = xt.shape[2]
    p = th * w

    t00 = xt[:th, :w, :].reshape(p, cin)                 # x[i,   j  ]
    t01 = xt[:th, 1:, :].reshape(p, cin)                 # x[i,   j+1]
    t10 = xt[1:, :w, :].reshape(p, cin)                  # x[i+1, j  ]
    t11 = xt[1:, 1:, :].reshape(p, cin)                  # x[i+1, j+1]

    acc = jnp.dot(t00, w_ref[0], preferred_element_type=jnp.float32)
    acc += jnp.dot(t01, w_ref[1], preferred_element_type=jnp.float32)
    acc += jnp.dot(t10, w_ref[2], preferred_element_type=jnp.float32)
    acc += jnp.dot(t11, w_ref[3], preferred_element_type=jnp.float32)
    acc += b_ref[...]                                    # (1, 4*Cout) broadcast

    y_ref[0, 0] = acc
    col_sum = jnp.sum(acc, axis=0, keepdims=True)        # (1, 4*Cout)
    col_sq = jnp.sum(acc * acc, axis=0, keepdims=True)   # (1, 4*Cout)
    stats_ref[0, 0] = jnp.concatenate([col_sum, col_sq], axis=0)


def _bn_relu_kernel(y_ref, scale_ref, shift_ref, o_ref):
    # y_ref/o_ref: (1, 1, TH*W, 4*Cout); scale/shift: (1, 4*Cout)  (f32 math)
    o_ref[0, 0] = jnp.maximum(y_ref[0, 0] * scale_ref[...] + shift_ref[...], 0.0)


def _pick_row_tile(h, w, target_pixels=2048):
    """Largest divisor of h whose tile (rows*w pixels) stays ~target_pixels."""
    max_rows = max(1, target_pixels // max(w, 1))
    best = 1
    for t in range(1, h + 1):
        if h % t == 0 and t <= max_rows:
            best = t
    return best


def upsampler_block(x_nchw, conv_w, conv_b, bn_gamma, bn_beta,
                    eps=1e-3, row_tile=None):
    """ERFNet UpsamplerBlock forward: ConvTranspose2d(3,s2,p1,op1) + BN + ReLU."""
    n, cin, h, w = x_nchw.shape
    assert conv_w.shape[0] == cin and conv_w.shape[2:] == (3, 3)
    cout = conv_w.shape[1]
    c4 = 4 * cout

    th = _pick_row_tile(h, w) if row_tile is None else int(row_tile)
    assert h % th == 0, (h, th)
    r = h // th
    pt = th * w

    # ---- glue: NCHW -> NHWC (channels on lanes), bf16 stream, halo'd row tiles
    xb = jnp.transpose(x_nchw, (0, 2, 3, 1)).astype(jnp.bfloat16)      # (N,H,W,Cin)
    xp = jnp.pad(xb, ((0, 0), (0, 1), (0, 1), (0, 0)))                 # zero halo
    xh = jnp.stack([xp[:, i * th:i * th + th + 1] for i in range(r)], axis=1)
    # xh: (N, R, TH+1, W+1, Cin)

    # ---- glue: pack the 3x3 transposed-conv weight into per-tap phase blocks.
    # Output phase p = 2a + b is output pixel (2i+a, 2j+b); with taps
    # T00=x[i,j], T01=x[i,j+1], T10=x[i+1,j], T11=x[i+1,j+1] the contributing
    # kernel slices W[:, :, kh, kw] are:
    wk = conv_w.astype(jnp.float32)                     # (Cin, Cout, 3, 3)
    z = jnp.zeros((cin, cout), jnp.float32)
    blk = lambda kh, kw: wk[:, :, kh, kw]               # (Cin, Cout)
    w_tap = jnp.stack([
        jnp.concatenate([blk(1, 1), blk(1, 2), blk(2, 1), blk(2, 2)], axis=1),  # T00
        jnp.concatenate([z,         blk(1, 0), z,         blk(2, 0)], axis=1),  # T01
        jnp.concatenate([z,         z,         blk(0, 1), blk(0, 2)], axis=1),  # T10
        jnp.concatenate([z,         z,         z,         blk(0, 0)], axis=1),  # T11
    ], axis=0).astype(jnp.bfloat16)                     # (4, Cin, 4*Cout)
    b4 = jnp.tile(conv_b.astype(jnp.float32), 4).reshape(1, c4)

    # ---- kernel 1: transposed conv + per-tile BN partial sums
    y, stats = pl.pallas_call(
        _upconv_kernel,
        out_shape=(jax.ShapeDtypeStruct((n, r, pt, c4), jnp.float32),
                   jax.ShapeDtypeStruct((n, r, 2, c4), jnp.float32)),
        grid=(n, r),
        in_specs=[
            pl.BlockSpec((1, 1, th + 1, w + 1, cin), lambda b, t: (b, t, 0, 0, 0)),
            pl.BlockSpec((4, cin, c4), lambda b, t: (0, 0, 0)),
            pl.BlockSpec((1, c4), lambda b, t: (0, 0)),
        ],
        out_specs=(
            pl.BlockSpec((1, 1, pt, c4), lambda b, t: (b, t, 0, 0)),
            pl.BlockSpec((1, 1, 2, c4), lambda b, t: (b, t, 0, 0)),
        ),
        compiler_params=pltpu.CompilerParams(
            dimension_semantics=("parallel", "parallel")),
    )(xh, w_tap, b4)

    # ---- glue: combine tiny per-tile partials into BN batch statistics
    count = jnp.float32(n * 4 * h * w)                   # elements per channel
    s = stats[:, :, 0, :].sum(axis=(0, 1)).reshape(4, cout).sum(axis=0)
    ss = stats[:, :, 1, :].sum(axis=(0, 1)).reshape(4, cout).sum(axis=0)
    mean = s / count
    var = jnp.maximum(ss / count - mean * mean, 0.0)     # biased (train-mode BN)
    inv = bn_gamma.astype(jnp.float32) / jnp.sqrt(var + eps)
    scale4 = jnp.tile(inv, 4).reshape(1, c4)
    shift4 = jnp.tile(bn_beta.astype(jnp.float32) - mean * inv, 4).reshape(1, c4)
    # TODO(synk): BatchNorm running_mean/running_var momentum update (training
    # bookkeeping, not part of the forward output) is not modeled.

    # ---- kernel 2: fused BN affine + ReLU, in place over y
    out_flat = pl.pallas_call(
        _bn_relu_kernel,
        out_shape=jax.ShapeDtypeStruct((n, r, pt, c4), jnp.float32),
        grid=(n, r),
        in_specs=[
            pl.BlockSpec((1, 1, pt, c4), lambda b, t: (b, t, 0, 0)),
            pl.BlockSpec((1, c4), lambda b, t: (0, 0)),
            pl.BlockSpec((1, c4), lambda b, t: (0, 0)),
        ],
        out_specs=pl.BlockSpec((1, 1, pt, c4), lambda b, t: (b, t, 0, 0)),
        input_output_aliases={0: 0},
        compiler_params=pltpu.CompilerParams(
            dimension_semantics=("parallel", "parallel")),
    )(y, scale4, shift4)

    # ---- glue: depth-to-space (phase unshuffle) + NHWC->NCHW for the API.
    # TODO(synk): this permute stays in XLA; folding it into kernel 2 would
    # need in-kernel multi-axis transposes of the (TH, W, 2, 2, Cout) block.
    out = out_flat.reshape(n, r, th, w, 2, 2, cout)      # (n, r, i, j, a, b, c)
    out = out.transpose(0, 6, 1, 2, 4, 3, 5)             # (n, c, r, i, a, j, b)
    return out.reshape(n, cout, 2 * h, 2 * w)


def _reference(x, conv_w, conv_b, gamma, beta, eps):
    """Pure-JAX reference: ConvTranspose2d(3,s2,p1,op1) + train-mode BN + ReLU."""
    wt = jnp.transpose(jnp.flip(conv_w, axis=(2, 3)), (1, 0, 2, 3))    # OIHW
    y = jax.lax.conv_general_dilated(
        x, wt, window_strides=(1, 1), padding=((1, 2), (1, 2)),
        lhs_dilation=(2, 2), dimension_numbers=("NCHW", "OIHW", "NCHW"),
        precision=jax.lax.Precision.HIGHEST)
    y = y + conv_b.reshape(1, -1, 1, 1)
    mean = y.mean(axis=(0, 2, 3), keepdims=True)
    var = ((y - mean) ** 2).mean(axis=(0, 2, 3), keepdims=True)
    yn = (y - mean) * jax.lax.rsqrt(var + eps)
    return jnp.maximum(gamma.reshape(1, -1, 1, 1) * yn + beta.reshape(1, -1, 1, 1), 0.0)


if __name__ == "__main__":
    # Small shapes consistent with UpsamplerBlock(ninput=4, noutput=16).
    N, Cin, H, W = 2, 4, 16, 16
    Cout = 16

    key = jax.random.PRNGKey(0)
    kx, kw, kb = jax.random.split(key, 3)
    x = jax.random.normal(kx, (N, Cin, H, W), dtype=jnp.float32)
    conv_w = 0.2 * jax.random.normal(kw, (Cin, Cout, 3, 3), dtype=jnp.float32)
    conv_b = 0.1 * jax.random.normal(kb, (Cout,), dtype=jnp.float32)
    bn_gamma = jnp.ones((Cout,), dtype=jnp.float32)   # PyTorch BatchNorm2d defaults
    bn_beta = jnp.zeros((Cout,), dtype=jnp.float32)

    fn = jax.jit(functools.partial(upsampler_block, row_tile=8))  # 2 row tiles
    out = fn(x, conv_w, conv_b, bn_gamma, bn_beta)
    jax.block_until_ready(out)

    assert out.shape == (N, Cout, 2 * H, 2 * W), out.shape
    assert bool(jnp.all(jnp.isfinite(out))) and bool(jnp.all(out >= 0.0))

    ref = _reference(x, conv_w, conv_b, bn_gamma, bn_beta, 1e-3)
    assert bool(jnp.allclose(out, ref, rtol=5e-2, atol=5e-2)), float(
        jnp.max(jnp.abs(out - ref)))
    print("KERNEL_OK")
</pallas_src>

<mosaic_0001>
module attributes {stable_mosaic.version = 11 : i64} {
  func.func @_upconv_kernel(%arg0: i32, %arg1: i32, %arg2: memref<1x1x9x17x4xbf16, #tpu.memory_space<vmem>>, %arg3: memref<4x4x64xbf16, #tpu.memory_space<vmem>>, %arg4: memref<1x64xf32, #tpu.memory_space<vmem>>, %arg5: memref<1x1x128x64xf32, #tpu.memory_space<vmem>>, %arg6: memref<1x1x2x64xf32, #tpu.memory_space<vmem>>) attributes {dimension_semantics = [#tpu.dimension_semantics<parallel>, #tpu.dimension_semantics<parallel>], iteration_bounds = array<i64: 2, 2>, scalar_prefetch = 0 : i64, scratch_operands = 0 : i64, tpu.core_type = #tpu.core_type<tc>, window_params = [{transform_indices = @transform_0, window_bounds = array<i64: 1, 1, 9, 17, 4>}, {pipeline_mode = #tpu.pipeline_mode<synchronous>, transform_indices = @transform_1, window_bounds = array<i64: 4, 4, 64>}, {pipeline_mode = #tpu.pipeline_mode<synchronous>, transform_indices = @transform_2, window_bounds = array<i64: 1, 64>}, {transform_indices = @transform_3, window_bounds = array<i64: 1, 1, 128, 64>}, {transform_indices = @transform_4, window_bounds = array<i64: 1, 1, 2, 64>}]} {
    %c0 = arith.constant 0 : index
    %c0_0 = arith.constant 0 : index
    %c0_1 = arith.constant 0 : index
    %c0_2 = arith.constant 0 : index
    %c0_3 = arith.constant 0 : index
    %0 = vector.load %arg2[%c0, %c0_0, %c0_1, %c0_2, %c0_3] : memref<1x1x9x17x4xbf16, #tpu.memory_space<vmem>>, vector<1x1x9x17x4xbf16>
    %1 = vector.shape_cast %0 : vector<1x1x9x17x4xbf16> to vector<9x17x4xbf16>
    %2 = vector.extract_strided_slice %1 {offsets = [0, 0, 0], sizes = [8, 16, 4], strides = [1, 1, 1]} : vector<9x17x4xbf16> to vector<8x16x4xbf16>
    %3 = vector.shape_cast %2 : vector<8x16x4xbf16> to vector<128x4xbf16>
    %4 = vector.extract_strided_slice %1 {offsets = [0, 1, 0], sizes = [8, 16, 4], strides = [1, 1, 1]} : vector<9x17x4xbf16> to vector<8x16x4xbf16>
    %5 = vector.shape_cast %4 : vector<8x16x4xbf16> to vector<128x4xbf16>
    %6 = vector.extract_strided_slice %1 {offsets = [1, 0, 0], sizes = [8, 16, 4], strides = [1, 1, 1]} : vector<9x17x4xbf16> to vector<8x16x4xbf16>
    %7 = vector.shape_cast %6 : vector<8x16x4xbf16> to vector<128x4xbf16>
    %8 = vector.extract_strided_slice %1 {offsets = [1, 1, 0], sizes = [8, 16, 4], strides = [1, 1, 1]} : vector<9x17x4xbf16> to vector<8x16x4xbf16>
    %9 = vector.shape_cast %8 : vector<8x16x4xbf16> to vector<128x4xbf16>
    %c0_4 = arith.constant 0 : index
    %c0_5 = arith.constant 0 : index
    %c0_6 = arith.constant 0 : index
    %10 = vector.load %arg3[%c0_4, %c0_5, %c0_6] : memref<4x4x64xbf16, #tpu.memory_space<vmem>>, vector<1x4x64xbf16>
    %11 = vector.shape_cast %10 : vector<1x4x64xbf16> to vector<4x64xbf16>
    %cst = arith.constant dense<0.000000e+00> : vector<128x64xf32>
    %12 = tpu.matmul %3, %11, %cst {dimension_numbers = #tpu.dot_dimension_numbers<[1], [0], [0], [1], [0, 0, 1, 1], [], []>} : vector<128x4xbf16>, vector<4x64xbf16>, vector<128x64xf32> -> vector<128x64xf32>
    %c1 = arith.constant 1 : index
    %c0_7 = arith.constant 0 : index
    %c0_8 = arith.constant 0 : index
    %13 = vector.load %arg3[%c1, %c0_7, %c0_8] : memref<4x4x64xbf16, #tpu.memory_space<vmem>>, vector<1x4x64xbf16>
    %14 = vector.shape_cast %13 : vector<1x4x64xbf16> to vector<4x64xbf16>
    %cst_9 = arith.constant dense<0.000000e+00> : vector<128x64xf32>
    %15 = tpu.matmul %5, %14, %cst_9 {dimension_numbers = #tpu.dot_dimension_numbers<[1], [0], [0], [1], [0, 0, 1, 1], [], []>} : vector<128x4xbf16>, vector<4x64xbf16>, vector<128x64xf32> -> vector<128x64xf32>
    %16 = arith.addf %12, %15 : vector<128x64xf32>
    %c2 = arith.constant 2 : index
    %c0_10 = arith.constant 0 : index
    %c0_11 = arith.constant 0 : index
    %17 = vector.load %arg3[%c2, %c0_10, %c0_11] : memref<4x4x64xbf16, #tpu.memory_space<vmem>>, vector<1x4x64xbf16>
    %18 = vector.shape_cast %17 : vector<1x4x64xbf16> to vector<4x64xbf16>
    %cst_12 = arith.constant dense<0.000000e+00> : vector<128x64xf32>
    %19 = tpu.matmul %7, %18, %cst_12 {dimension_numbers = #tpu.dot_dimension_numbers<[1], [0], [0], [1], [0, 0, 1, 1], [], []>} : vector<128x4xbf16>, vector<4x64xbf16>, vector<128x64xf32> -> vector<128x64xf32>
    %20 = arith.addf %16, %19 : vector<128x64xf32>
    %c3 = arith.constant 3 : index
    %c0_13 = arith.constant 0 : index
    %c0_14 = arith.constant 0 : index
    %21 = vector.load %arg3[%c3, %c0_13, %c0_14] : memref<4x4x64xbf16, #tpu.memory_space<vmem>>, vector<1x4x64xbf16>
    %22 = vector.shape_cast %21 : vector<1x4x64xbf16> to vector<4x64xbf16>
    %cst_15 = arith.constant dense<0.000000e+00> : vector<128x64xf32>
    %23 = tpu.matmul %9, %22, %cst_15 {dimension_numbers = #tpu.dot_dimension_numbers<[1], [0], [0], [1], [0, 0, 1, 1], [], []>} : vector<128x4xbf16>, vector<4x64xbf16>, vector<128x64xf32> -> vector<128x64xf32>
    %24 = arith.addf %20, %23 : vector<128x64xf32>
    %c0_16 = arith.constant 0 : index
    %c0_17 = arith.constant 0 : index
    %25 = vector.load %arg4[%c0_16, %c0_17] : memref<1x64xf32, #tpu.memory_space<vmem>>, vector<1x64xf32>
    %26 = vector.broadcast %25 : vector<1x64xf32> to vector<128x64xf32>
    %27 = arith.addf %24, %26 : vector<128x64xf32>
    %c0_18 = arith.constant 0 : index
    %c0_19 = arith.constant 0 : index
    %c0_20 = arith.constant 0 : index
    %c0_21 = arith.constant 0 : index
    %28 = vector.load %arg5[%c0_18, %c0_19, %c0_20, %c0_21] : memref<1x1x128x64xf32, #tpu.memory_space<vmem>>, vector<1x1x128x64xf32>
    %29 = vector.shape_cast %28 : vector<1x1x128x64xf32> to vector<128x64xf32>
    %30 = vector.shape_cast %27 : vector<128x64xf32> to vector<1x1x128x64xf32>
    tpu.vector_store %arg5[%c0_18, %c0_19, %c0_20, %c0_21], %30 {strides = array<i32>} : memref<1x1x128x64xf32, #tpu.memory_space<vmem>>, vector<1x1x128x64xf32>,
    %cst_22 = arith.constant dense<0.000000e+00> : vector<64xf32>
    %31 = vector.multi_reduction <add>, %27, %cst_22 [0] : vector<128x64xf32> to vector<64xf32>
    %32 = vector.shape_cast %31 : vector<64xf32> to vector<1x64xf32>
    %33 = arith.mulf %27, %27 : vector<128x64xf32>
    %cst_23 = arith.constant dense<0.000000e+00> : vector<64xf32>
    %34 = vector.multi_reduction <add>, %33, %cst_23 [0] : vector<128x64xf32> to vector<64xf32>
    %35 = vector.shape_cast %34 : vector<64xf32> to vector<1x64xf32>
    %36 = tpu.concatenate %32, %35 in 0 : vector<1x64xf32>, vector<1x64xf32> -> vector<2x64xf32>
    %c0_24 = arith.constant 0 : index
    %c0_25 = arith.constant 0 : index
    %c0_26 = arith.constant 0 : index
    %c0_27 = arith.constant 0 : index
    %37 = vector.load %arg6[%c0_24, %c0_25, %c0_26, %c0_27] : memref<1x1x2x64xf32, #tpu.memory_space<vmem>>, vector<1x1x2x64xf32>
    %38 = vector.shape_cast %37 : vector<1x1x2x64xf32> to vector<2x64xf32>
    %39 = vector.shape_cast %36 : vector<2x64xf32> to vector<1x1x2x64xf32>
    tpu.vector_store %arg6[%c0_24, %c0_25, %c0_26, %c0_27], %39 {strides = array<i32>} : memref<1x1x2x64xf32, #tpu.memory_space<vmem>>, vector<1x1x2x64xf32>,
    return
  }
  func.func @transform_0(%arg0: i32, %arg1: i32) -> (i32, i32, i32, i32, i32) {
    %c0_i32 = arith.constant 0 : i32
    %c0_i32_0 = arith.constant 0 : i32
    %c0_i32_1 = arith.constant 0 : i32
    %c0_i32_2 = arith.constant 0 : i32
    return %arg0, %arg1, %c0_i32, %c0_i32_0, %c0_i32_1 : i32, i32, i32, i32, i32
  }
  func.func @transform_1(%arg0: i32, %arg1: i32) -> (i32, i32, i32) {
    %c0_i32 = arith.constant 0 : i32
    %c0_i32_0 = arith.constant 0 : i32
    %c0_i32_1 = arith.constant 0 : i32
    %c0_i32_2 = arith.constant 0 : i32
    return %c0_i32, %c0_i32_0, %c0_i32_1 : i32, i32, i32
  }
  func.func @transform_2(%arg0: i32, %arg1: i32) -> (i32, i32) {
    %c0_i32 = arith.constant 0 : i32
    %c0_i32_0 = arith.constant 0 : i32
    %c0_i32_1 = arith.constant 0 : i32
    return %c0_i32, %c0_i32_0 : i32, i32
  }
  func.func @transform_3(%arg0: i32, %arg1: i32) -> (i32, i32, i32, i32) {
    %c0_i32 = arith.constant 0 : i32
    %c0_i32_0 = arith.constant 0 : i32
    %c0_i32_1 = arith.constant 0 : i32
    return %arg0, %arg1, %c0_i32, %c0_i32_0 : i32, i32, i32, i32
  }
  func.func @transform_4(%arg0: i32, %arg1: i32) -> (i32, i32, i32, i32) {
    %c0_i32 = arith.constant 0 : i32
    %c0_i32_0 = arith.constant 0 : i32
    %c0_i32_1 = arith.constant 0 : i32
    return %arg0, %arg1, %c0_i32, %c0_i32_0 : i32, i32, i32, i32
  }
}

module attributes {stable_mosaic.version = 11 : i64} {
  func.func @_bn_relu_kernel(%arg0: i32, %arg1: i32, %arg2: memref<1x1x128x64xf32, #tpu.memory_space<vmem>>, %arg3: memref<1x64xf32, #tpu.memory_space<vmem>>, %arg4: memref<1x64xf32, #tpu.memory_space<vmem>>, %arg5: memref<1x1x128x64xf32, #tpu.memory_space<vmem>>) attributes {dimension_semantics = [#tpu.dimension_semantics<parallel>, #tpu.dimension_semantics<parallel>], iteration_bounds = array<i64: 2, 2>, scalar_prefetch = 0 : i64, scratch_operands = 0 : i64, tpu.core_type = #tpu.core_type<tc>, window_params = [{transform_indices = @transform_0, window_bounds = array<i64: 1, 1, 128, 64>}, {pipeline_mode = #tpu.pipeline_mode<synchronous>, transform_indices = @transform_1, window_bounds = array<i64: 1, 64>}, {pipeline_mode = #tpu.pipeline_mode<synchronous>, transform_indices = @transform_2, window_bounds = array<i64: 1, 64>}, {transform_indices = @transform_3, window_bounds = array<i64: 1, 1, 128, 64>}]} {
    %c0 = arith.constant 0 : index
    %c0_0 = arith.constant 0 : index
    %c0_1 = arith.constant 0 : index
    %c0_2 = arith.constant 0 : index
    %0 = vector.load %arg2[%c0, %c0_0, %c0_1, %c0_2] : memref<1x1x128x64xf32, #tpu.memory_space<vmem>>, vector<1x1x128x64xf32>
    %1 = vector.shape_cast %0 : vector<1x1x128x64xf32> to vector<128x64xf32>
    %c0_3 = arith.constant 0 : index
    %c0_4 = arith.constant 0 : index
    %2 = vector.load %arg3[%c0_3, %c0_4] : memref<1x64xf32, #tpu.memory_space<vmem>>, vector<1x64xf32>
    %3 = vector.broadcast %2 : vector<1x64xf32> to vector<128x64xf32>
    %4 = arith.mulf %1, %3 : vector<128x64xf32>
    %c0_5 = arith.constant 0 : index
    %c0_6 = arith.constant 0 : index
    %5 = vector.load %arg4[%c0_5, %c0_6] : memref<1x64xf32, #tpu.memory_space<vmem>>, vector<1x64xf32>
    %6 = vector.broadcast %5 : vector<1x64xf32> to vector<128x64xf32>
    %7 = arith.addf %4, %6 : vector<128x64xf32>
    %cst = arith.constant 0.000000e+00 : f32
    %8 = vector.broadcast %cst : f32 to vector<128x64xf32>
    %9 = arith.maximumf %7, %8 : vector<128x64xf32>
    %c0_7 = arith.constant 0 : index
    %c0_8 = arith.constant 0 : index
    %c0_9 = arith.constant 0 : index
    %c0_10 = arith.constant 0 : index
    %10 = vector.load %arg5[%c0_7, %c0_8, %c0_9, %c0_10] : memref<1x1x128x64xf32, #tpu.memory_space<vmem>>, vector<1x1x128x64xf32>
    %11 = vector.shape_cast %10 : vector<1x1x128x64xf32> to vector<128x64xf32>
    %12 = vector.shape_cast %9 : vector<128x64xf32> to vector<1x1x128x64xf32>
    tpu.vector_store %arg5[%c0_7, %c0_8, %c0_9, %c0_10], %12 {strides = array<i32>} : memref<1x1x128x64xf32, #tpu.memory_space<vmem>>, vector<1x1x128x64xf32>,
    return
  }
  func.func @transform_0(%arg0: i32, %arg1: i32) -> (i32, i32, i32, i32) {
    %c0_i32 = arith.constant 0 : i32
    %c0_i32_0 = arith.constant 0 : i32
    %c0_i32_1 = arith.constant 0 : i32
    return %arg0, %arg1, %c0_i32, %c0_i32_0 : i32, i32, i32, i32
  }
  func.func @transform_1(%arg0: i32, %arg1: i32) -> (i32, i32) {
    %c0_i32 = arith.constant 0 : i32
    %c0_i32_0 = arith.constant 0 : i32
    %c0_i32_1 = arith.constant 0 : i32
    return %c0_i32, %c0_i32_0 : i32, i32
  }
  func.func @transform_2(%arg0: i32, %arg1: i32) -> (i32, i32) {
    %c0_i32 = arith.constant 0 : i32
    %c0_i32_0 = arith.constant 0 : i32
    %c0_i32_1 = arith.constant 0 : i32
    return %c0_i32, %c0_i32_0 : i32, i32
  }
  func.func @transform_3(%arg0: i32, %arg1: i32) -> (i32, i32, i32, i32) {
    %c0_i32 = arith.constant 0 : i32
    %c0_i32_0 = arith.constant 0 : i32
    %c0_i32_1 = arith.constant 0 : i32
    return %arg0, %arg1, %c0_i32, %c0_i32_0 : i32, i32, i32, i32
  }
}

</mosaic_0001>

<llo_original>
// kernel: tile.18
$region0: #{tile.18}
  #allocation0 [shape = 's32[1]{0}', space=sflag, size = 0x4, scoped, tag = 'scoped memory for tile.18']
  %s0 = inlined_call_operand.vmem [shape: f32[16], index: 0, kind: input, shape index: {}]
  %s1 = inlined_call_operand.vmem [shape: f32[4,16], index: 1, kind: output, shape index: {}]
  // Predicated region
  $region2: #{tile.18} parent=0 // pred_check
    _
  $region3: #{tile.18} parent=0 // pred_check_branch
    %3 = sbr.rel (0) target = $region5
  $region4: #{tile.18} parent=0 // pred_region
    _
  $region5: #{tile.18} parent=0 // pred_fallthru
    _
  %v4 = vld [vmem:[%s0] ss:$0 sm:$0xff]
  %5 = vst [vmem:[%s1] sm:$0xf] %v4

// kernel: tile.19
$region0: #{tile.19}
  %s0 = inlined_call_operand.vmem [shape: f32[4,16], index: 0, kind: input, shape index: {}]
  %s1 = inlined_call_operand.vmem [shape: f32[1,64], index: 1, kind: output, shape index: {}]
  $region1: #{tile.19} parent=0
    #allocation0 [shape = 'u8[4096]{0}', space=vmem, size = 0x1000, scoped, tag = 'scoped mem for output reshape']
    #allocation1 [shape = 'u8[4096]{0}', space=vmem, size = 0x1000, scoped, tag = 'scoped mem for input reshape']
    %s3 = sshllo.u32 0, 4
    %v4 = vld [vmem:[%s0] sm:%s3]
    %5 = vst [vmem:[#allocation1] sm:%s3] %v4
    %v6 = vld [vmem:[#allocation1] sm:$0x1]
    %vm7 = vcmask 130048
    %8 = vst.msk [vmem:[#allocation0] sm:$0x1] %vm7, %v6
    %s9 = scalar_lea.vmem [#allocation1], 3
    %v10 = vld [vmem:[%s9] sm:$0x1]
    %11 = vrot.lane.b32.xlu0 %v10, 48
    %v12 = vpop.permute.xlu0 %11
    %vm13 = vcmask 523648
    %14 = vst.msk [vmem:[#allocation0] sm:$0x1] %vm13, %v12
    %s15 = scalar_lea.vmem [#allocation1], 2
    %v16 = vld [vmem:[%s15] sm:$0x1]
    %17 = vrot.lane.b32.xlu0 %v16, 32
    %v18 = vpop.permute.xlu0 %17
    %vm19 = vcmask 392448
    %20 = vst.msk [vmem:[#allocation0] sm:$0x1] %vm19, %v18
    %s21 = scalar_lea.vmem [#allocation1], 1
    %v22 = vld [vmem:[%s21] sm:$0x1]
    %23 = vrot.lane.b32.xlu0 %v22, 16
    %v24 = vpop.permute.xlu0 %23
    %vm25 = vcmask 261248
    %26 = vst.msk [vmem:[#allocation0] sm:$0x1] %vm25, %v24
    %s28 = sshllo.u32 0, 1
    %v30 = vld [vmem:[#allocation0] sm:%s28]
    %s31 = sshllo.u32 0, 1
    %32 = vst [vmem:[%s1] sm:%s31] %v30

// kernel: upsampler_block.3
$region0: #{upsampler_block.3}
  #allocation0 [shape = 'u32[]', space=smem, size = 0x4, offset = 0x4, fixed_abs, tag = 'smem constant byte address 0x4 - core index']
  #allocation1 [shape = 'u32[144,128]{1,0:T(1,128)}', space=vmem, size = 0x12000, scoped, tag = 'internal scratch']
  %s0 = inlined_call_operand.vmem [shape: f32[2,2,128,64], index: 0, kind: input, shape index: {}, may-alias: {0,3}]
  %s1 = inlined_call_operand.vmem [shape: f32[1,64], index: 1, kind: input, shape index: {}]
  %s2 = inlined_call_operand.vmem [shape: f32[1,64], index: 2, kind: input, shape index: {}]
  %s3 = inlined_call_operand.vmem [shape: f32[2,2,128,64], index: 3, kind: output, shape index: {}, may-alias: {0,3}]
  %s4 = sld [smem:[#allocation0]]
  $region45: #{upsampler_block.3} parent=0
    _
  %s6 = ssub.s32 1, %s4
  %s7 = scalar_select 0, %s6, %s4
  loop: start=0, step=1, limit=6
  $region2: #{upsampler_block.3} parent=0 // loop_pre_header
    _
  $region3: #{upsampler_block.3} parent=0 // loop_header
    %s9 = sphi 0, %s13
    %p10 = scmp.ge.s32.totalorder %s9, 6
    %s16 = sphi 0, %s28
    %s17 = sphi 0, %s24
    %s18 = sphi 0, %s16
    %s19 = sphi 0, %s17
    %s20 = sphi 0, %s18
    %s21 = sphi 0, %s19
    %s33 = sphi 0, %s35
    %s36 = sphi 0, %s33
    %s37 = sphi 0, %s36
    %s53 = sphi 0, %s37
    %s57 = sphi 0, %s57
    %s59 = sphi 0, %s57
    %s60 = sphi 0, %s59
    %s74 = sphi 0, %s60
    %s78 = sphi 0, %s78
    %s80 = sphi 0, %s78
    %s81 = sphi 0, %s80
    %s95 = sphi 0, %s81
    %s103 = sphi 0, %s105
    %s106 = sphi 0, %s103
    %s107 = sphi 0, %s106
    %s123 = sphi 0, %s107
  $region4: #{upsampler_block.3} parent=0 // loop_header_branch
    %12 = sbr.rel (%p10) target = $region8
  $region5: #{upsampler_block.3} parent=0 // loop_body
    %s14 = ssub.s32 %s9, 1
    %s15 = ssub.s32 %s9, 2
    %s22 = sadd.s32 1, %s17
    %p23 = scmp.ge.s32.totalorder %s22, 2
    %s24 = scalar_select %p23, 0, %s22
    %s25 = sadd.s32 1, %s16
    %s26 = scalar_select %p23, %s25, %s16
    %p27 = scmp.ge.s32.totalorder %s26, 2
    %s28 = scalar_select %p27, 0, %s26
    %s29 = ssub.s32 %s16, %s28
    %s30 = ssub.s32 %s17, %s24
    %s31 = sor.u32 %s29, %s30
    %p32 = scmp.eq.s32.totalorder %s31, 0
    %s34 = sadd.s32 %s33, 1
    %s35 = scalar_select %p32, %s33, %s34
    %p38 = pneg %p32
    %p39 = scmp.eq.s32.totalorder %s9, 3
    %p40 = por %p38, %p39
    %p41 = scmp.ne.s32.totalorder %s33, %s36
    %p42 = scmp.eq.s32.totalorder %s9, 0
    %p43 = por %p41, %p42
    %p44 = scmp.ne.s32.totalorder %s33, %s36
    %p45 = scmp.eq.s32.totalorder %s14, 3
    %p46 = por %p44, %p45
    %p47 = scmp.ne.s32.totalorder %s36, %s37
    %p48 = scmp.eq.s32.totalorder %s14, 0
    %p49 = por %p47, %p48
    %p50 = scmp.ne.s32.totalorder %s36, %s37
    %p51 = scmp.eq.s32.totalorder %s15, 3
    %p52 = por %p50, %p51
    %p54 = scmp.ne.s32.totalorder %s37, %s53
    %p55 = scmp.eq.s32.totalorder %s15, 0
    %p56 = por %p54, %p55
    %s58 = sadd.s32 %s57, 1
    %p61 = scmp.eq.s32.totalorder %s9, 3
    %p62 = scmp.ne.s32.totalorder %s57, %s59
    %p63 = scmp.eq.s32.totalorder %s9, 0
    %p64 = por %p62, %p63
    %p65 = scmp.ne.s32.totalorder %s57, %s59
    %p66 = scmp.eq.s32.totalorder %s14, 3
    %p67 = por %p65, %p66
    %p68 = scmp.ne.s32.totalorder %s59, %s60
    %p69 = scmp.eq.s32.totalorder %s14, 0
    %p70 = por %p68, %p69
    %p71 = scmp.ne.s32.totalorder %s59, %s60
    %p72 = scmp.eq.s32.totalorder %s15, 3
    %p73 = por %p71, %p72
    %p75 = scmp.ne.s32.totalorder %s60, %s74
    %p76 = scmp.eq.s32.totalorder %s15, 0
    %p77 = por %p75, %p76
    %s79 = sadd.s32 %s78, 1
    %p82 = scmp.eq.s32.totalorder %s9, 3
    %p83 = scmp.ne.s32.totalorder %s78, %s80
    %p84 = scmp.eq.s32.totalorder %s9, 0
    %p85 = por %p83, %p84
    %p86 = scmp.ne.s32.totalorder %s78, %s80
    %p87 = scmp.eq.s32.totalorder %s14, 3
    %p88 = por %p86, %p87
    %p89 = scmp.ne.s32.totalorder %s80, %s81
    %p90 = scmp.eq.s32.totalorder %s14, 0
    %p91 = por %p89, %p90
    %p92 = scmp.ne.s32.totalorder %s80, %s81
    %p93 = scmp.eq.s32.totalorder %s15, 3
    %p94 = por %p92, %p93
    %p96 = scmp.ne.s32.totalorder %s81, %s95
    %p97 = scmp.eq.s32.totalorder %s15, 0
    %p98 = por %p96, %p97
    %s99 = ssub.s32 %s16, %s28
    %s100 = ssub.s32 %s17, %s24
    %s101 = sor.u32 %s99, %s100
    %p102 = scmp.eq.s32.totalorder %s101, 0
    %s104 = sadd.s32 %s103, 1
    %s105 = scalar_select %p102, %s103, %s104
    %p108 = pneg %p102
    %p109 = scmp.eq.s32.totalorder %s9, 3
    %p110 = por %p108, %p109
    %p111 = scmp.ne.s32.totalorder %s103, %s106
    %p112 = scmp.eq.s32.totalorder %s9, 0
    %p113 = por %p111, %p112
    %p114 = scmp.ne.s32.totalorder %s103, %s106
    %p115 = scmp.eq.s32.totalorder %s14, 3
    %p116 = por %p114, %p115
    %p117 = scmp.ne.s32.totalorder %s106, %s107
    %p118 = scmp.eq.s32.totalorder %s14, 0
    %p119 = por %p117, %p118
    %p120 = scmp.ne.s32.totalorder %s106, %s107
    %p121 = scmp.eq.s32.totalorder %s15, 3
    %p122 = por %p120, %p121
    %p124 = scmp.ne.s32.totalorder %s107, %s123
    %p125 = scmp.eq.s32.totalorder %s15, 0
    %p126 = por %p124, %p125
    %p127 = scmp.le.s32.totalorder 1, %s9
    %p128 = scmp.lt.s32.totalorder %s9, 5
    %p129 = pnand %p127, %p128
    %p130 = pneg %p129
    // Predicated region
    $region9: #{upsampler_block.3} parent=5 // pred_check
      _
    $region10: #{upsampler_block.3} parent=5 // pred_check_branch
      %132 = sbr.rel (%p129) target = $region12
    $region11: #{upsampler_block.3} parent=5 // pred_region
      %s133 = ssub.s32 %s9, 1
      // Predicated region
      $region13: #{upsampler_block.3} parent=11 // pred_check
        %p134 = pneg %p70
      $region14: #{upsampler_block.3} parent=11 // pred_check_branch
        %136 = sbr.rel (%p134) target = $region16
      $region15: #{upsampler_block.3} parent=11 // pred_region
        _
      $region16: #{upsampler_block.3} parent=11 // pred_fallthru
        _
      // Predicated region
      $region17: #{upsampler_block.3} parent=11 // pred_check
        %p137 = pneg %p91
      $region18: #{upsampler_block.3} parent=11 // pred_check_branch
        %139 = sbr.rel (%p137) target = $region20
      $region19: #{upsampler_block.3} parent=11 // pred_region
        _
      $region20: #{upsampler_block.3} parent=11 // pred_fallthru
        _
    $region12: #{upsampler_block.3} parent=5 // pred_fallthru
      _
    %p140 = scmp.lt.s32.totalorder %s9, 4
    // Predicated region
    $region21: #{upsampler_block.3} parent=5 // pred_check
      %p141 = pneg %p140
    $region22: #{upsampler_block.3} parent=5 // pred_check_branch
      %143 = sbr.rel (%p141) target = $region24
    $region23: #{upsampler_block.3} parent=5 // pred_region
      // Predicated region
      $region25: #{upsampler_block.3} parent=23 // pred_check
        %p144 = pneg %p43
      $region26: #{upsampler_block.3} parent=23 // pred_check_branch
        %146 = sbr.rel (%p144) target = $region28
      $region27: #{upsampler_block.3} parent=23 // pred_region
        %p147 = scmp.lt.s32.totalorder %s16, 1
        %s148 = scalar_select %p147, %s16, 1
        %p149 = scmp.lt.s32.totalorder %s17, 1
        %s150 = scalar_select %p149, %s17, 1
        %s151 = smul.addr %s150, 16
        %s152 = smul.addr %s148, 32
        %s153 = sadd.s32 %s151, %s152
        %s154 = smul.addr %s153, 8
        %s155 = scalar_lea.vmem %s0, %s154
      $region28: #{upsampler_block.3} parent=23 // pred_fallthru
        _
    $region24: #{upsampler_block.3} parent=5 // pred_fallthru
      _
    %p156 = scmp.le.s32.totalorder 1, %s9
    %p157 = scmp.lt.s32.totalorder %s9, 5
    %p158 = pnand %p156, %p157
    %p159 = pneg %p158
    // Predicated region
    $region29: #{upsampler_block.3} parent=5 // pred_check
      _
    $region30: #{upsampler_block.3} parent=5 // pred_check_branch
      %161 = sbr.rel (%p158) target = $region32
    $region31: #{upsampler_block.3} parent=5 // pred_region
      %s162 = ssub.s32 %s9, 1
      %p163 = scmp.lt.s32.totalorder %s18, 1
      %s164 = scalar_select %p163, %s18, 1
      %p165 = scmp.lt.s32.totalorder %s19, 1
      %s166 = scalar_select %p165, %s19, 1
      %s167 = smul.addr %s166, 16
      %s168 = smul.addr %s164, 32
      %s169 = sadd.s32 %s167, %s168
      %s170 = smul.addr %s169, 8
      %s171 = scalar_lea.vmem %s0, %s170
      %p172 = pneg %p49
      %p173 = pneg %p46
      %p174 = pneg %p70
      %p175 = pneg %p67
      %p176 = pneg %p91
      %p177 = pneg %p88
      %p178 = pneg %p119
      %p179 = pneg %p116
      %p180 = scmp.lt.s32.totalorder %s18, 1
      %s181 = scalar_select %p180, %s18, 1
      %p182 = scmp.lt.s32.totalorder %s19, 1
      %s183 = scalar_select %p182, %s19, 1
      %s184 = smul.addr %s183, 16
      %s185 = smul.addr %s181, 32
      %s186 = sadd.s32 %s184, %s185
      %s187 = smul.addr %s186, 8
      %s188 = scalar_lea.vmem %s3, %s187
      %p189 = scmp.lt.s32.totalorder %s18, 1
      %s190 = scalar_select %p189, %s18, 1
      %p191 = scmp.lt.s32.totalorder %s19, 1
      %s192 = scalar_select %p191, %s19, 1
      %s193 = smul.addr %s192, 16
      %s194 = smul.addr %s190, 32
      %s195 = sadd.s32 %s193, %s194
      %s196 = smul.addr %s195, 8
      %s197 = scalar_lea.vmem %s0, %s196
      %p198 = scmp.lt.s32.totalorder %s18, 1
      %s199 = scalar_select %p198, %s18, 1
      %p200 = scmp.lt.s32.totalorder %s19, 1
      %s201 = scalar_select %p200, %s19, 1
      %s202 = smul.addr %s201, 16
      %s203 = smul.addr %s199, 32
      %s204 = sadd.s32 %s202, %s203
      %s205 = smul.addr %s204, 8
      %s206 = scalar_lea.vmem %s3, %s205
      %v207 = vld [vmem:[%s197] sm:$0xff]
      %v208 = vld [vmem:[%s197 + $0x8] sm:$0xff]
      %v209 = vld [vmem:[%s197 + $0x10] sm:$0xff]
      %v210 = vld [vmem:[%s197 + $0x18] sm:$0xff]
      %v211 = vld [vmem:[%s197 + $0x20] sm:$0xff]
      %v212 = vld [vmem:[%s197 + $0x28] sm:$0xff]
      %v213 = vld [vmem:[%s197 + $0x30] sm:$0xff]
      %v214 = vld [vmem:[%s197 + $0x38] sm:$0xff]
      %v215 = vld [vmem:[%s197 + $0x40] sm:$0xff]
      %v216 = vld [vmem:[%s197 + $0x48] sm:$0xff]
      %v217 = vld [vmem:[%s197 + $0x50] sm:$0xff]
      %v218 = vld [vmem:[%s197 + $0x58] sm:$0xff]
      %v219 = vld [vmem:[%s197 + $0x60] sm:$0xff]
      %v220 = vld [vmem:[%s197 + $0x68] sm:$0xff]
      %v221 = vld [vmem:[%s197 + $0x70] sm:$0xff]
      %v222 = vld [vmem:[%s197 + $0x78] sm:$0xff]
      %v223 = vld [vmem:[%s1] sm:$0x1]
      %v225 = vlaneseq
      %v226 = vshrl.u32 %v225, 7
      %v227 = vsub.s32 0, %v226
      %v228 = vrot.slane %v223, %v227
      %v230 = vmul.f32 %v207, %v228
      %v231 = vmul.f32 %v208, %v228
      %v232 = vmul.f32 %v209, %v228
      %v233 = vmul.f32 %v210, %v228
      %v234 = vmul.f32 %v211, %v228
      %v235 = vmul.f32 %v212, %v228
      %v236 = vmul.f32 %v213, %v228
      %v237 = vmul.f32 %v214, %v228
      %v238 = vmul.f32 %v215, %v228
      %v239 = vmul.f32 %v216, %v228
      %v240 = vmul.f32 %v217, %v228
      %v241 = vmul.f32 %v218, %v228
      %v242 = vmul.f32 %v219, %v228
      %v243 = vmul.f32 %v220, %v228
      %v244 = vmul.f32 %v221, %v228
      %v245 = vmul.f32 %v222, %v228
      %v246 = vld [vmem:[%s2] sm:$0x1]
      %v248 = vlaneseq
      %v249 = vshrl.u32 %v248, 7
      %v250 = vsub.s32 0, %v249
      %v251 = vrot.slane %v246, %v250
      %v253 = vadd.f32 %v230, %v251
      %v254 = vadd.f32 %v231, %v251
      %v255 = vadd.f32 %v232, %v251
      %v256 = vadd.f32 %v233, %v251
      %v257 = vadd.f32 %v234, %v251
      %v258 = vadd.f32 %v235, %v251
      %v259 = vadd.f32 %v236, %v251
      %v260 = vadd.f32 %v237, %v251
      %v261 = vadd.f32 %v238, %v251
      %v262 = vadd.f32 %v239, %v251
      %v263 = vadd.f32 %v240, %v251
      %v264 = vadd.f32 %v241, %v251
      %v265 = vadd.f32 %v242, %v251
      %v266 = vadd.f32 %v243, %v251
      %v267 = vadd.f32 %v244, %v251
      %v268 = vadd.f32 %v245, %v251
      %v269 = vmax.f32 %v253, 0.0
      %v270 = vmax.f32 %v254, 0.0
      %v271 = vmax.f32 %v255, 0.0
      %v272 = vmax.f32 %v256, 0.0
      %v273 = vmax.f32 %v257, 0.0
      %v274 = vmax.f32 %v258, 0.0
      %v275 = vmax.f32 %v259, 0.0
      %v276 = vmax.f32 %v260, 0.0
      %v277 = vmax.f32 %v261, 0.0
      %v278 = vmax.f32 %v262, 0.0
      %v279 = vmax.f32 %v263, 0.0
      %v280 = vmax.f32 %v264, 0.0
      %v281 = vmax.f32 %v265, 0.0
      %v282 = vmax.f32 %v266, 0.0
      %v283 = vmax.f32 %v267, 0.0
      %v284 = vmax.f32 %v268, 0.0
      %vm285 = vcmask 523264
      %286 = vst.msk [vmem:[%s206] sm:$0xff] %vm285, %v269
      %287 = vst.msk [vmem:[%s206 + $0x8] sm:$0xff] %vm285, %v270
      %288 = vst.msk [vmem:[%s206 + $0x10] sm:$0xff] %vm285, %v271
      %289 = vst.msk [vmem:[%s206 + $0x18] sm:$0xff] %vm285, %v272
      %290 = vst.msk [vmem:[%s206 + $0x20] sm:$0xff] %vm285, %v273
      %291 = vst.msk [vmem:[%s206 + $0x28] sm:$0xff] %vm285, %v274
      %292 = vst.msk [vmem:[%s206 + $0x30] sm:$0xff] %vm285, %v275
      %293 = vst.msk [vmem:[%s206 + $0x38] sm:$0xff] %vm285, %v276
      %294 = vst.msk [vmem:[%s206 + $0x40] sm:$0xff] %vm285, %v277
      %295 = vst.msk [vmem:[%s206 + $0x48] sm:$0xff] %vm285, %v278
      %296 = vst.msk [vmem:[%s206 + $0x50] sm:$0xff] %vm285, %v279
      %297 = vst.msk [vmem:[%s206 + $0x58] sm:$0xff] %vm285, %v280
      %298 = vst.msk [vmem:[%s206 + $0x60] sm:$0xff] %vm285, %v281
      %299 = vst.msk [vmem:[%s206 + $0x68] sm:$0xff] %vm285, %v282
      %300 = vst.msk [vmem:[%s206 + $0x70] sm:$0xff] %vm285, %v283
      %301 = vst.msk [vmem:[%s206 + $0x78] sm:$0xff] %vm285, %v284
      %p302 = scmp.lt.s32.totalorder %s18, 1
      %s303 = scalar_select %p302, %s18, 1
      %p304 = scmp.lt.s32.totalorder %s19, 1
      %s305 = scalar_select %p304, %s19, 1
      %s306 = smul.addr %s305, 16
      %s307 = smul.addr %s303, 32
      %s308 = sadd.s32 %s306, %s307
      %s309 = smul.addr %s308, 8
      %s310 = scalar_lea.vmem %s3, %s309
      // Predicated region
      $region33: #{upsampler_block.3} parent=31 // pred_check
        %p311 = pneg %p116
      $region34: #{upsampler_block.3} parent=31 // pred_check_branch
        %313 = sbr.rel (%p311) target = $region36
      $region35: #{upsampler_block.3} parent=31 // pred_region
        _
      $region36: #{upsampler_block.3} parent=31 // pred_fallthru
        _
    $region32: #{upsampler_block.3} parent=5 // pred_fallthru
      _
    %p314 = scmp.le.s32.totalorder 2, %s9
    // Predicated region
    $region37: #{upsampler_block.3} parent=5 // pred_check
      %p315 = pneg %p314
    $region38: #{upsampler_block.3} parent=5 // pred_check_branch
      %317 = sbr.rel (%p315) target = $region40
    $region39: #{upsampler_block.3} parent=5 // pred_region
      %s318 = ssub.s32 %s9, 2
      // Predicated region
      $region41: #{upsampler_block.3} parent=39 // pred_check
        %p319 = pneg %p122
      $region42: #{upsampler_block.3} parent=39 // pred_check_branch
        %321 = sbr.rel (%p319) target = $region44
      $region43: #{upsampler_block.3} parent=39 // pred_region
        %p322 = scmp.lt.s32.totalorder %s20, 1
        %s323 = scalar_select %p322, %s20, 1
        %p324 = scmp.lt.s32.totalorder %s21, 1
        %s325 = scalar_select %p324, %s21, 1
        %s326 = smul.addr %s325, 16
        %s327 = smul.addr %s323, 32
        %s328 = sadd.s32 %s326, %s327
        %s329 = smul.addr %s328, 8
        %s330 = scalar_lea.vmem %s3, %s329
      $region44: #{upsampler_block.3} parent=39 // pred_fallthru
        _
    $region40: #{upsampler_block.3} parent=5 // pred_fallthru
      _
  $region6: #{upsampler_block.3} parent=0 // loop_footer
    %s13 = sadd.s32 1, %s9
  $region7: #{upsampler_block.3} parent=0 // loop_footer_branch
    %8 = sbr.rel target = $region3
  $region8: #{upsampler_block.3} parent=0 // loop_exit
    _

// kernel: upsampler_block.2
$region0: #{upsampler_block.2}
  #allocation0 [shape = 'u32[]', space=smem, size = 0x4, offset = 0x4, fixed_abs, tag = 'smem constant byte address 0x4 - core index']
  #allocation1 [shape = 'u32[144,128]{1,0:T(1,128)}', space=vmem, size = 0x12000, scoped, tag = 'internal scratch']
  %s0 = inlined_call_operand.vmem [shape: bf16[2,2,9,17,4], index: 0, kind: input, shape index: {}]
  %s1 = inlined_call_operand.vmem [shape: bf16[4,4,64], index: 1, kind: input, shape index: {}]
  %s2 = inlined_call_operand.vmem [shape: f32[1,64], index: 2, kind: input, shape index: {}]
  %s3 = inlined_call_operand.vmem [shape: f32[2,2,128,64], index: 3, kind: output, shape index: {0}]
  %s4 = inlined_call_operand.vmem [shape: f32[2,2,2,64], index: 4, kind: output, shape index: {1}]
  %5 = xla_tuple %s3, %s4
  %s6 = sld [smem:[#allocation0]]
  $region53: #{upsampler_block.2} parent=0
    _
  %s8 = ssub.s32 1, %s6
  %s9 = scalar_select 0, %s8, %s6
  loop: start=0, step=1, limit=6
  $region2: #{upsampler_block.2} parent=0 // loop_pre_header
    _
  $region3: #{upsampler_block.2} parent=0 // loop_header
    %s11 = sphi 0, %s15
    %p12 = scmp.ge.s32.totalorder %s11, 6
    %s18 = sphi 0, %s30
    %s19 = sphi 0, %s26
    %s20 = sphi 0, %s18
    %s21 = sphi 0, %s19
    %s22 = sphi 0, %s20
    %s23 = sphi 0, %s21
    %s35 = sphi 0, %s37
    %s38 = sphi 0, %s35
    %s39 = sphi 0, %s38
    %s55 = sphi 0, %s39
    %s59 = sphi 0, %s59
    %s61 = sphi 0, %s59
    %s62 = sphi 0, %s61
    %s76 = sphi 0, %s62
    %s80 = sphi 0, %s80
    %s82 = sphi 0, %s80
    %s83 = sphi 0, %s82
    %s97 = sphi 0, %s83
    %s105 = sphi 0, %s107
    %s108 = sphi 0, %s105
    %s109 = sphi 0, %s108
    %s125 = sphi 0, %s109
    %s133 = sphi 0, %s135
    %s136 = sphi 0, %s133
    %s137 = sphi 0, %s136
    %s153 = sphi 0, %s137
  $region4: #{upsampler_block.2} parent=0 // loop_header_branch
    %14 = sbr.rel (%p12) target = $region8
  $region5: #{upsampler_block.2} parent=0 // loop_body
    %s16 = ssub.s32 %s11, 1
    %s17 = ssub.s32 %s11, 2
    %s24 = sadd.s32 1, %s19
    %p25 = scmp.ge.s32.totalorder %s24, 2
    %s26 = scalar_select %p25, 0, %s24
    %s27 = sadd.s32 1, %s18
    %s28 = scalar_select %p25, %s27, %s18
    %p29 = scmp.ge.s32.totalorder %s28, 2
    %s30 = scalar_select %p29, 0, %s28
    %s31 = ssub.s32 %s18, %s30
    %s32 = ssub.s32 %s19, %s26
    %s33 = sor.u32 %s31, %s32
    %p34 = scmp.eq.s32.totalorder %s33, 0
    %s36 = sadd.s32 %s35, 1
    %s37 = scalar_select %p34, %s35, %s36
    %p40 = pneg %p34
    %p41 = scmp.eq.s32.totalorder %s11, 3
    %p42 = por %p40, %p41
    %p43 = scmp.ne.s32.totalorder %s35, %s38
    %p44 = scmp.eq.s32.totalorder %s11, 0
    %p45 = por %p43, %p44
    %p46 = scmp.ne.s32.totalorder %s35, %s38
    %p47 = scmp.eq.s32.totalorder %s16, 3
    %p48 = por %p46, %p47
    %p49 = scmp.ne.s32.totalorder %s38, %s39
    %p50 = scmp.eq.s32.totalorder %s16, 0
    %p51 = por %p49, %p50
    %p52 = scmp.ne.s32.totalorder %s38, %s39
    %p53 = scmp.eq.s32.totalorder %s17, 3
    %p54 = por %p52, %p53
    %p56 = scmp.ne.s32.totalorder %s39, %s55
    %p57 = scmp.eq.s32.totalorder %s17, 0
    %p58 = por %p56, %p57
    %s60 = sadd.s32 %s59, 1
    %p63 = scmp.eq.s32.totalorder %s11, 3
    %p64 = scmp.ne.s32.totalorder %s59, %s61
    %p65 = scmp.eq.s32.totalorder %s11, 0
    %p66 = por %p64, %p65
    %p67 = scmp.ne.s32.totalorder %s59, %s61
    %p68 = scmp.eq.s32.totalorder %s16, 3
    %p69 = por %p67, %p68
    %p70 = scmp.ne.s32.totalorder %s61, %s62
    %p71 = scmp.eq.s32.totalorder %s16, 0
    %p72 = por %p70, %p71
    %p73 = scmp.ne.s32.totalorder %s61, %s62
    %p74 = scmp.eq.s32.totalorder %s17, 3
    %p75 = por %p73, %p74
    %p77 = scmp.ne.s32.totalorder %s62, %s76
    %p78 = scmp.eq.s32.totalorder %s17, 0
    %p79 = por %p77, %p78
    %s81 = sadd.s32 %s80, 1
    %p84 = scmp.eq.s32.totalorder %s11, 3
    %p85 = scmp.ne.s32.totalorder %s80, %s82
    %p86 = scmp.eq.s32.totalorder %s11, 0
    %p87 = por %p85, %p86
    %p88 = scmp.ne.s32.totalorder %s80, %s82
    %p89 = scmp.eq.s32.totalorder %s16, 3
    %p90 = por %p88, %p89
    %p91 = scmp.ne.s32.totalorder %s82, %s83
    %p92 = scmp.eq.s32.totalorder %s16, 0
    %p93 = por %p91, %p92
    %p94 = scmp.ne.s32.totalorder %s82, %s83
    %p95 = scmp.eq.s32.totalorder %s17, 3
    %p96 = por %p94, %p95
    %p98 = scmp.ne.s32.totalorder %s83, %s97
    %p99 = scmp.eq.s32.totalorder %s17, 0
    %p100 = por %p98, %p99
    %s101 = ssub.s32 %s18, %s30
    %s102 = ssub.s32 %s19, %s26
    %s103 = sor.u32 %s101, %s102
    %p104 = scmp.eq.s32.totalorder %s103, 0
    %s106 = sadd.s32 %s105, 1
    %s107 = scalar_select %p104, %s105, %s106
    %p110 = pneg %p104
    %p111 = scmp.eq.s32.totalorder %s11, 3
    %p112 = por %p110, %p111
    %p113 = scmp.ne.s32.totalorder %s105, %s108
    %p114 = scmp.eq.s32.totalorder %s11, 0
    %p115 = por %p113, %p114
    %p116 = scmp.ne.s32.totalorder %s105, %s108
    %p117 = scmp.eq.s32.totalorder %s16, 3
    %p118 = por %p116, %p117
    %p119 = scmp.ne.s32.totalorder %s108, %s109
    %p120 = scmp.eq.s32.totalorder %s16, 0
    %p121 = por %p119, %p120
    %p122 = scmp.ne.s32.totalorder %s108, %s109
    %p123 = scmp.eq.s32.totalorder %s17, 3
    %p124 = por %p122, %p123
    %p126 = scmp.ne.s32.totalorder %s109, %s125
    %p127 = scmp.eq.s32.totalorder %s17, 0
    %p128 = por %p126, %p127
    %s129 = ssub.s32 %s18, %s30
    %s130 = ssub.s32 %s19, %s26
    %s131 = sor.u32 %s129, %s130
    %p132 = scmp.eq.s32.totalorder %s131, 0
    %s134 = sadd.s32 %s133, 1
    %s135 = scalar_select %p132, %s133, %s134
    %p138 = pneg %p132
    %p139 = scmp.eq.s32.totalorder %s11, 3
    %p140 = por %p138, %p139
    %p141 = scmp.ne.s32.totalorder %s133, %s136
    %p142 = scmp.eq.s32.totalorder %s11, 0
    %p143 = por %p141, %p142
    %p144 = scmp.ne.s32.totalorder %s133, %s136
    %p145 = scmp.eq.s32.totalorder %s16, 3
    %p146 = por %p144, %p145
    %p147 = scmp.ne.s32.totalorder %s136, %s137
    %p148 = scmp.eq.s32.totalorder %s16, 0
    %p149 = por %p147, %p148
    %p150 = scmp.ne.s32.totalorder %s136, %s137
    %p151 = scmp.eq.s32.totalorder %s17, 3
    %p152 = por %p150, %p151
    %p154 = scmp.ne.s32.totalorder %s137, %s153
    %p155 = scmp.eq.s32.totalorder %s17, 0
    %p156 = por %p154, %p155
    %p157 = scmp.le.s32.totalorder 1, %s11
    %p158 = scmp.lt.s32.totalorder %s11, 5
    %p159 = pnand %p157, %p158
    %p160 = pneg %p159
    // Predicated region
    $region9: #{upsampler_block.2} parent=5 // pred_check
      _
    $region10: #{upsampler_block.2} parent=5 // pred_check_branch
      %162 = sbr.rel (%p159) target = $region12
    $region11: #{upsampler_block.2} parent=5 // pred_region
      %s163 = ssub.s32 %s11, 1
      // Predicated region
      $region13: #{upsampler_block.2} parent=11 // pred_check
        %p164 = pneg %p72
      $region14: #{upsampler_block.2} parent=11 // pred_check_branch
        %166 = sbr.rel (%p164) target = $region16
      $region15: #{upsampler_block.2} parent=11 // pred_region
        _
      $region16: #{upsampler_block.2} parent=11 // pred_fallthru
        _
      // Predicated region
      $region17: #{upsampler_block.2} parent=11 // pred_check
        %p167 = pneg %p93
      $region18: #{upsampler_block.2} parent=11 // pred_check_branch
        %169 = sbr.rel (%p167) target = $region20
      $region19: #{upsampler_block.2} parent=11 // pred_region
        _
      $region20: #{upsampler_block.2} parent=11 // pred_fallthru
        _
    $region12: #{upsampler_block.2} parent=5 // pred_fallthru
      _
    %p170 = scmp.lt.s32.totalorder %s11, 4
    // Predicated region
    $region21: #{upsampler_block.2} parent=5 // pred_check
      %p171 = pneg %p170
    $region22: #{upsampler_block.2} parent=5 // pred_check_branch
      %173 = sbr.rel (%p171) target = $region24
    $region23: #{upsampler_block.2} parent=5 // pred_region
      // Predicated region
      $region25: #{upsampler_block.2} parent=23 // pred_check
        %p174 = pneg %p45
      $region26: #{upsampler_block.2} parent=23 // pred_check_branch
        %176 = sbr.rel (%p174) target = $region28
      $region27: #{upsampler_block.2} parent=23 // pred_region
        %p177 = scmp.lt.s32.totalorder %s18, 1
        %s178 = scalar_select %p177, %s18, 1
        %p179 = scmp.lt.s32.totalorder %s19, 1
        %s180 = scalar_select %p179, %s19, 1
        %s181 = smul.addr %s180, 27
        %s182 = smul.addr %s178, 54
        %s183 = sadd.s32 %s181, %s182
        %s184 = smul.addr %s183, 4
        %s185 = scalar_lea.vmem %s0, %s184
      $region28: #{upsampler_block.2} parent=23 // pred_fallthru
        _
    $region24: #{upsampler_block.2} parent=5 // pred_fallthru
      _
    %p186 = scmp.le.s32.totalorder 1, %s11
    %p187 = scmp.lt.s32.totalorder %s11, 5
    %p188 = pnand %p186, %p187
    %p189 = pneg %p188
    // Predicated region
    $region29: #{upsampler_block.2} parent=5 // pred_check
      _
    $region30: #{upsampler_block.2} parent=5 // pred_check_branch
      %191 = sbr.rel (%p188) target = $region32
    $region31: #{upsampler_block.2} parent=5 // pred_region
      %s192 = ssub.s32 %s11, 1
      %p193 = scmp.lt.s32.totalorder %s20, 1
      %s194 = scalar_select %p193, %s20, 1
      %p195 = scmp.lt.s32.totalorder %s21, 1
      %s196 = scalar_select %p195, %s21, 1
      %s197 = smul.addr %s196, 27
      %s198 = smul.addr %s194, 54
      %s199 = sadd.s32 %s197, %s198
      %s200 = smul.addr %s199, 4
      %s201 = scalar_lea.vmem %s0, %s200
      %p202 = pneg %p51
      %p203 = pneg %p48
      %p204 = pneg %p72
      %p205 = pneg %p69
      %p206 = pneg %p93
      %p207 = pneg %p90
      %p208 = pneg %p121
      %p209 = pneg %p118
      %p210 = scmp.lt.s32.totalorder %s20, 1
      %s211 = scalar_select %p210, %s20, 1
      %p212 = scmp.lt.s32.totalorder %s21, 1
      %s213 = scalar_select %p212, %s21, 1
      %s214 = smul.addr %s213, 16
      %s215 = smul.addr %s211, 32
      %s216 = sadd.s32 %s214, %s215
      %s217 = smul.addr %s216, 8
      %s218 = scalar_lea.vmem %s3, %s217
      %p219 = pneg %p149
      %p220 = pneg %p146
      %p221 = scmp.lt.s32.totalorder %s20, 1
      %s222 = scalar_select %p221, %s20, 1
      %p223 = scmp.lt.s32.totalorder %s21, 1
      %s224 = scalar_select %p223, %s21, 1
      %s225 = smul.addr %s222, 2
      %s226 = sadd.s32 %s224, %s225
      %s227 = smul.addr %s226, 2
      %s228 = scalar_lea.vmem %s4, %s227
      %p229 = scmp.lt.s32.totalorder %s20, 1
      %s230 = scalar_select %p229, %s20, 1
      %p231 = scmp.lt.s32.totalorder %s21, 1
      %s232 = scalar_select %p231, %s21, 1
      %s233 = smul.addr %s232, 27
      %s234 = smul.addr %s230, 54
      %s235 = sadd.s32 %s233, %s234
      %s236 = smul.addr %s235, 4
      %s237 = scalar_lea.vmem %s0, %s236
      %p238 = scmp.lt.s32.totalorder %s20, 1
      %s239 = scalar_select %p238, %s20, 1
      %p240 = scmp.lt.s32.totalorder %s21, 1
      %s241 = scalar_select %p240, %s21, 1
      %s242 = smul.addr %s241, 16
      %s243 = smul.addr %s239, 32
      %s244 = sadd.s32 %s242, %s243
      %s245 = smul.addr %s244, 8
      %s246 = scalar_lea.vmem %s3, %s245
      %p247 = scmp.lt.s32.totalorder %s20, 1
      %s248 = scalar_select %p247, %s20, 1
      %p249 = scmp.lt.s32.totalorder %s21, 1
      %s250 = scalar_select %p249, %s21, 1
      %s251 = smul.addr %s248, 2
      %s252 = sadd.s32 %s250, %s251
      %s253 = smul.addr %s252, 2
      %s254 = scalar_lea.vmem %s4, %s253
      %v256 = vld [vmem:[%s237] sm:$0xf]
      %v257 = vld [vmem:[%s237 + $0x4] sm:$0xf]
      %v258 = vld [vmem:[%s237 + $0x8] sm:$0x1]
      %v259 = vld [vmem:[%s237 + $0xc] sm:$0xf]
      %v260 = vld [vmem:[%s237 + $0x10] sm:$0xf]
      %v261 = vld [vmem:[%s237 + $0x14] sm:$0x1]
      %v262 = vld [vmem:[%s237 + $0x18] sm:$0xf]
      %v263 = vld [vmem:[%s237 + $0x1c] sm:$0xf]
      %v264 = vld [vmem:[%s237 + $0x20] sm:$0x1]
      %v265 = vld [vmem:[%s237 + $0x24] sm:$0xf]
      %v266 = vld [vmem:[%s237 + $0x28] sm:$0xf]
      %v267 = vld [vmem:[%s237 + $0x2c] sm:$0x1]
      %v268 = vld [vmem:[%s237 + $0x30] sm:$0xf]
      %v269 = vld [vmem:[%s237 + $0x34] sm:$0xf]
      %v270 = vld [vmem:[%s237 + $0x38] sm:$0x1]
      %v271 = vld [vmem:[%s237 + $0x3c] sm:$0xf]
      %v272 = vld [vmem:[%s237 + $0x40] sm:$0xf]
      %v273 = vld [vmem:[%s237 + $0x44] sm:$0x1]
      %v274 = vld [vmem:[%s237 + $0x48] sm:$0xf]
      %v275 = vld [vmem:[%s237 + $0x4c] sm:$0xf]
      %v276 = vld [vmem:[%s237 + $0x50] sm:$0x1]
      %v277 = vld [vmem:[%s237 + $0x54] sm:$0xf]
      %v278 = vld [vmem:[%s237 + $0x58] sm:$0xf]
      %v279 = vld [vmem:[%s237 + $0x5c] sm:$0x1]
      %v280 = vld [vmem:[%s237 + $0x60] sm:$0xf]
      %v281 = vld [vmem:[%s237 + $0x64] sm:$0xf]
      %v282 = vld [vmem:[%s237 + $0x68] sm:$0x1]
      %vm283 = vsmask.f32 3328
      %vm284 = vsmask.f32 7440
      %vm285 = vmor %vm283, %vm284
      %v287 = vshrl.u32 %v256, 16
      %v289 = vrot.slane %v287, 4
      %v290 = vshll.u32 %v256, 16
      %v292 = vrot.slane %v290, 5
      %v293 = vor.u32 %v289, %v292
      %v294 = vrot.slane %v293, 4
      %v296 = vshll.u32 %v257, 16
      %v298 = vrot.slane %v296, 5
      %v299 = vsel %vm285, %v294, %v298
      %v300 = vshrl.u32 %v257, 16
      %v302 = vrot.slane %v300, 4
      %v303 = vor.u32 %v302, %v298
      %v304 = vrot.slane %v303, 4
      %v306 = vshll.u32 %v258, 16
      %v308 = vrot.slane %v306, 5
      %v309 = vsel %vm285, %v304, %v308
      %v311 = vshrl.u32 %v259, 16
      %v313 = vrot.slane %v311, 4
      %v314 = vshll.u32 %v259, 16
      %v316 = vrot.slane %v314, 5
      %v317 = vor.u32 %v313, %v316
      %v318 = vrot.slane %v317, 4
      %v320 = vshll.u32 %v260, 16
      %v322 = vrot.slane %v320, 5
      %v323 = vsel %vm285, %v318, %v322
      %v324 = vshrl.u32 %v260, 16
      %v326 = vrot.slane %v324, 4
      %v327 = vor.u32 %v326, %v322
      %v328 = vrot.slane %v327, 4
      %v330 = vshll.u32 %v261, 16
      %v332 = vrot.slane %v330, 5
      %v333 = vsel %vm285, %v328, %v332
      %v335 = vshrl.u32 %v262, 16
      %v337 = vrot.slane %v335, 4
      %v338 = vshll.u32 %v262, 16
      %v340 = vrot.slane %v338, 5
      %v341 = vor.u32 %v337, %v340
      %v342 = vrot.slane %v341, 4
      %v344 = vshll.u32 %v263, 16
      %v346 = vrot.slane %v344, 5
      %v347 = vsel %vm285, %v342, %v346
      %v348 = vshrl.u32 %v263, 16
      %v350 = vrot.slane %v348, 4
      %v351 = vor.u32 %v350, %v346
      %v352 = vrot.slane %v351, 4
      %v354 = vshll.u32 %v264, 16
      %v356 = vrot.slane %v354, 5
      %v357 = vsel %vm285, %v352, %v356
      %v359 = vshrl.u32 %v265, 16
      %v361 = vrot.slane %v359, 4
      %v362 = vshll.u32 %v265, 16
      %v364 = vrot.slane %v362, 5
      %v365 = vor.u32 %v361, %v364
      %v366 = vrot.slane %v365, 4
      %v368 = vshll.u32 %v266, 16
      %v370 = vrot.slane %v368, 5
      %v371 = vsel %vm285, %v366, %v370
      %v372 = vshrl.u32 %v266, 16
      %v374 = vrot.slane %v372, 4
      %v375 = vor.u32 %v374, %v370
      %v376 = vrot.slane %v375, 4
      %v378 = vshll.u32 %v267, 16
      %v380 = vrot.slane %v378, 5
      %v381 = vsel %vm285, %v376, %v380
      %v383 = vshrl.u32 %v268, 16
      %v385 = vrot.slane %v383, 4
      %v386 = vshll.u32 %v268, 16
      %v388 = vrot.slane %v386, 5
      %v389 = vor.u32 %v385, %v388
      %v390 = vrot.slane %v389, 4
      %v392 = vshll.u32 %v269, 16
      %v394 = vrot.slane %v392, 5
      %v395 = vsel %vm285, %v390, %v394
      %v396 = vshrl.u32 %v269, 16
      %v398 = vrot.slane %v396, 4
      %v399 = vor.u32 %v398, %v394
      %v400 = vrot.slane %v399, 4
      %v402 = vshll.u32 %v270, 16
      %v404 = vrot.slane %v402, 5
      %v405 = vsel %vm285, %v400, %v404
      %v407 = vshrl.u32 %v271, 16
      %v409 = vrot.slane %v407, 4
      %v410 = vshll.u32 %v271, 16
      %v412 = vrot.slane %v410, 5
      %v413 = vor.u32 %v409, %v412
      %v414 = vrot.slane %v413, 4
      %v416 = vshll.u32 %v272, 16
      %v418 = vrot.slane %v416, 5
      %v419 = vsel %vm285, %v414, %v418
      %v420 = vshrl.u32 %v272, 16
      %v422 = vrot.slane %v420, 4
      %v423 = vor.u32 %v422, %v418
      %v424 = vrot.slane %v423, 4
      %v426 = vshll.u32 %v273, 16
      %v428 = vrot.slane %v426, 5
      %v429 = vsel %vm285, %v424, %v428
      %v431 = vshrl.u32 %v274, 16
      %v433 = vrot.slane %v431, 4
      %v434 = vshll.u32 %v274, 16
      %v436 = vrot.slane %v434, 5
      %v437 = vor.u32 %v433, %v436
      %v438 = vrot.slane %v437, 4
      %v440 = vshll.u32 %v275, 16
      %v442 = vrot.slane %v440, 5
      %v443 = vsel %vm285, %v438, %v442
      %v444 = vshrl.u32 %v275, 16
      %v446 = vrot.slane %v444, 4
      %v447 = vor.u32 %v446, %v442
      %v448 = vrot.slane %v447, 4
      %v450 = vshll.u32 %v276, 16
      %v452 = vrot.slane %v450, 5
      %v453 = vsel %vm285, %v448, %v452
      %v455 = vshrl.u32 %v277, 16
      %v457 = vrot.slane %v455, 4
      %v458 = vshll.u32 %v277, 16
      %v460 = vrot.slane %v458, 5
      %v461 = vor.u32 %v457, %v460
      %v462 = vrot.slane %v461, 4
      %v464 = vshll.u32 %v278, 16
      %v466 = vrot.slane %v464, 5
      %v467 = vsel %vm285, %v462, %v466
      %v468 = vshrl.u32 %v278, 16
      %v470 = vrot.slane %v468, 4
      %v471 = vor.u32 %v470, %v466
      %v472 = vrot.slane %v471, 4
      %v474 = vshll.u32 %v279, 16
      %v476 = vrot.slane %v474, 5
      %v477 = vsel %vm285, %v472, %v476
      %v479 = vshrl.u32 %v280, 16
      %v481 = vrot.slane %v479, 4
      %v482 = vshll.u32 %v280, 16
      %v484 = vrot.slane %v482, 5
      %v485 = vor.u32 %v481, %v484
      %v486 = vrot.slane %v485, 4
      %v488 = vshll.u32 %v281, 16
      %v490 = vrot.slane %v488, 5
      %v491 = vsel %vm285, %v486, %v490
      %v492 = vshrl.u32 %v281, 16
      %v494 = vrot.slane %v492, 4
      %v495 = vor.u32 %v494, %v490
      %v496 = vrot.slane %v495, 4
      %v498 = vshll.u32 %v282, 16
      %v500 = vrot.slane %v498, 5
      %v501 = vsel %vm285, %v496, %v500
      %v502 = vld [vmem:[%s1] sm:$0x3]
      %s503 = scalar_lea.vmem %s1, 2
      %v504 = vld [vmem:[%s503] sm:$0x3]
      %v505 = vunpack.c.l.b16 %v299
      %v506 = vunpack.c.l.b16 %v309
      %v507 = vunpack.c.l.b16 %v323
      %v508 = vunpack.c.l.b16 %v333
      %v509 = vunpack.c.l.b16 %v347
      %v510 = vunpack.c.l.b16 %v357
      %v511 = vunpack.c.l.b16 %v371
      %v512 = vunpack.c.l.b16 %v381
      %v513 = vunpack.c.l.b16 %v395
      %v514 = vunpack.c.l.b16 %v405
      %v515 = vunpack.c.l.b16 %v419
      %v516 = vunpack.c.l.b16 %v429
      %v517 = vunpack.c.l.b16 %v443
      %v518 = vunpack.c.l.b16 %v453
      %v519 = vunpack.c.l.b16 %v467
      %v520 = vunpack.c.l.b16 %v477
      %v521 = vpack.c.b16 %v506, %v505
      %v522 = vpack.c.b16 %v508, %v507
      %v523 = vpack.c.b16 %v510, %v509
      %v524 = vpack.c.b16 %v512, %v511
      %v525 = vpack.c.b16 %v514, %v513
      %v526 = vpack.c.b16 %v516, %v515
      %v527 = vpack.c.b16 %v518, %v517
      %v528 = vpack.c.b16 %v520, %v519
      %vm529 = vcmask 31744
      %v531 = vsel %vm529, %v521, 0
      %v534 = vsel %vm529, %v522, 0
      %v537 = vsel %vm529, %v523, 0
      %v540 = vsel %vm529, %v524, 0
      %v543 = vsel %vm529, %v525, 0
      %v546 = vsel %vm529, %v526, 0
      %v549 = vsel %vm529, %v527, 0
      %v552 = vsel %vm529, %v528, 0
      %vm554 = vcmask 1041408
      %v556 = vsel %vm554, %v504, 0
      %558 = vmatprep.subr.bf16.mxu0 0
      %559 = vmatpush1.bf16.msra.mxu0 %v556
      %560 = vmatprep.subr.bf16.mxu0 0
      %561 = vmatpush1.bf16.msra.mxu0 0
      %562 = vmatprep.subr.bf16.mxu0 0
      %563 = vmatpush1.bf16.msra.mxu0 0
      %564 = vmatprep.subr.bf16.mxu0 0
      %565 = vmatpush1.bf16.msra.mxu0 0
      %566 = vmatprep.subr.bf16.mxu0 0
      %567 = vmatpush1.bf16.msra.mxu0 0
      %568 = vmatprep.subr.bf16.mxu0 0
      %569 = vmatpush1.bf16.msra.mxu0 0
      %570 = vmatprep.subr.bf16.mxu0 0
      %571 = vmatpush1.bf16.msra.mxu0 0
      %572 = vmatprep.subr.bf16.mxu0 0
      %573 = vmatpush1.bf16.msra.mxu0 0
      %574 = vmatprep.subr.bf16.mxu0 0
      %575 = vmatpush1.bf16.msra.mxu0 0
      %576 = vmatprep.subr.bf16.mxu0 0
      %577 = vmatpush1.bf16.msra.mxu0 0
      %578 = vmatprep.subr.bf16.mxu0 0
      %579 = vmatpush1.bf16.msra.mxu0 0
      %580 = vmatprep.subr.bf16.mxu0 0
      %581 = vmatpush1.bf16.msra.mxu0 0
      %582 = vmatprep.subr.bf16.mxu0 0
      %583 = vmatpush1.bf16.msra.mxu0 0
      %584 = vmatprep.subr.bf16.mxu0 0
      %585 = vmatpush1.bf16.msra.mxu0 0
      %586 = vmatprep.subr.bf16.mxu0 0
      %587 = vmatpush1.bf16.msra.mxu0 0
      %588 = vmatprep.subr.bf16.mxu0 0
      %589 = vmatpush1.bf16.msra.mxu0 0
      %590 = vmatprep.mubr.bf16.mxu0 0
      %591 = vmatmul.mubr.bf16.gmra.mrb[0].mxu0 %v531
      %v592 = vpop.f32.mrb[0].mxu0
      %v593 = vadd.f32 0.0, %v592
      %v594 = vpop.f32.mrb[0].mxu0
      %v595 = vpop.f32.mrb[0].mxu0
      %v596 = vadd.f32 0.0, %v595
      %v597 = vpop.f32.mrb[0].mxu0
      %598 = vmatprep.mubr.bf16.mxu0 0
      %599 = vmatmul.mubr.bf16.gmra.mrb[0].mxu0 %v534
      %v600 = vpop.f32.mrb[0].mxu0
      %v601 = vadd.f32 0.0, %v600
      %v602 = vpop.f32.mrb[0].mxu0
      %v603 = vpop.f32.mrb[0].mxu0
      %v604 = vadd.f32 0.0, %v603
      %v605 = vpop.f32.mrb[0].mxu0
      %606 = vmatprep.mubr.bf16.mxu0 0
      %607 = vmatmul.mubr.bf16.gmra.mrb[0].mxu0 %v537
      %v608 = vpop.f32.mrb[0].mxu0
      %v609 = vadd.f32 0.0, %v608
      %v610 = vpop.f32.mrb[0].mxu0
      %v611 = vpop.f32.mrb[0].mxu0
      %v612 = vadd.f32 0.0, %v611
      %v613 = vpop.f32.mrb[0].mxu0
      %614 = vmatprep.mubr.bf16.mxu0 0
      %615 = vmatmul.mubr.bf16.gmra.mrb[0].mxu0 %v540
      %v616 = vpop.f32.mrb[0].mxu0
      %v617 = vadd.f32 0.0, %v616
      %v618 = vpop.f32.mrb[0].mxu0
      %v619 = vpop.f32.mrb[0].mxu0
      %v620 = vadd.f32 0.0, %v619
      %v621 = vpop.f32.mrb[0].mxu0
      %622 = vmatprep.mubr.bf16.mxu0 0
      %623 = vmatmul.mubr.bf16.gmra.mrb[0].mxu0 %v543
      %v624 = vpop.f32.mrb[0].mxu0
      %v625 = vadd.f32 0.0, %v624
      %v626 = vpop.f32.mrb[0].mxu0
      %v627 = vpop.f32.mrb[0].mxu0
      %v628 = vadd.f32 0.0, %v627
      %v629 = vpop.f32.mrb[0].mxu0
      %630 = vmatprep.mubr.bf16.mxu0 0
      %631 = vmatmul.mubr.bf16.gmra.mrb[0].mxu0 %v546
      %v632 = vpop.f32.mrb[0].mxu0
      %v633 = vadd.f32 0.0, %v632
      %v634 = vpop.f32.mrb[0].mxu0
      %v635 = vpop.f32.mrb[0].mxu0
      %v636 = vadd.f32 0.0, %v635
      %v637 = vpop.f32.mrb[0].mxu0
      %638 = vmatprep.mubr.bf16.mxu0 0
      %639 = vmatmul.mubr.bf16.gmra.mrb[0].mxu0 %v549
      %v640 = vpop.f32.mrb[0].mxu0
      %v641 = vadd.f32 0.0, %v640
      %v642 = vpop.f32.mrb[0].mxu0
      %v643 = vpop.f32.mrb[0].mxu0
      %v644 = vadd.f32 0.0, %v643
      %v645 = vpop.f32.mrb[0].mxu0
      %646 = vmatprep.mubr.bf16.mxu0 0
      %647 = vmatmul.mubr.bf16.gmra.mrb[0].mxu0 %v552
      %v648 = vpop.f32.mrb[0].mxu0
      %v649 = vadd.f32 0.0, %v648
      %v650 = vpop.f32.mrb[0].mxu0
      %v651 = vpop.f32.mrb[0].mxu0
      %v652 = vadd.f32 0.0, %v651
      %v653 = vpop.f32.mrb[0].mxu0
      %654 = vdwg.mxu0
      %v671 = vunpack.c.l.b16 %v256
      %v672 = vunpack.c.l.b16 %v257
      %v673 = vunpack.c.l.b16 %v259
      %v674 = vunpack.c.l.b16 %v260
      %v675 = vunpack.c.l.b16 %v262
      %v676 = vunpack.c.l.b16 %v263
      %v677 = vunpack.c.l.b16 %v265
      %v678 = vunpack.c.l.b16 %v266
      %v679 = vunpack.c.l.b16 %v268
      %v680 = vunpack.c.l.b16 %v269
      %v681 = vunpack.c.l.b16 %v271
      %v682 = vunpack.c.l.b16 %v272
      %v683 = vunpack.c.l.b16 %v274
      %v684 = vunpack.c.l.b16 %v275
      %v685 = vunpack.c.l.b16 %v277
      %v686 = vunpack.c.l.b16 %v278
      %v687 = vpack.c.b16 %v672, %v671
      %v688 = vpack.c.b16 %v674, %v673
      %v689 = vpack.c.b16 %v676, %v675
      %v690 = vpack.c.b16 %v678, %v677
      %v691 = vpack.c.b16 %v680, %v679
      %v692 = vpack.c.b16 %v682, %v681
      %v693 = vpack.c.b16 %v684, %v683
      %v694 = vpack.c.b16 %v686, %v685
      %v696 = vsel %vm529, %v687, 0
      %v699 = vsel %vm529, %v688, 0
      %v702 = vsel %vm529, %v689, 0
      %v705 = vsel %vm529, %v690, 0
      %v708 = vsel %vm529, %v691, 0
      %v711 = vsel %vm529, %v692, 0
      %v714 = vsel %vm529, %v693, 0
      %v717 = vsel %vm529, %v694, 0
      %v720 = vsel %vm554, %v502, 0
      %722 = vmatprep.subr.bf16.mxu0 0
      %723 = vmatpush1.bf16.msra.mxu0 %v720
      %724 = vmatprep.subr.bf16.mxu0 0
      %725 = vmatpush1.bf16.msra.mxu0 0
      %726 = vmatprep.subr.bf16.mxu0 0
      %727 = vmatpush1.bf16.msra.mxu0 0
      %728 = vmatprep.subr.bf16.mxu0 0
      %729 = vmatpush1.bf16.msra.mxu0 0
      %730 = vmatprep.subr.bf16.mxu0 0
      %731 = vmatpush1.bf16.msra.mxu0 0
      %732 = vmatprep.subr.bf16.mxu0 0
      %733 = vmatpush1.bf16.msra.mxu0 0
      %734 = vmatprep.subr.bf16.mxu0 0
      %735 = vmatpush1.bf16.msra.mxu0 0
      %736 = vmatprep.subr.bf16.mxu0 0
      %737 = vmatpush1.bf16.msra.mxu0 0
      %738 = vmatprep.subr.bf16.mxu0 0
      %739 = vmatpush1.bf16.msra.mxu0 0
      %740 = vmatprep.subr.bf16.mxu0 0
      %741 = vmatpush1.bf16.msra.mxu0 0
      %742 = vmatprep.subr.bf16.mxu0 0
      %743 = vmatpush1.bf16.msra.mxu0 0
      %744 = vmatprep.subr.bf16.mxu0 0
      %745 = vmatpush1.bf16.msra.mxu0 0
      %746 = vmatprep.subr.bf16.mxu0 0
      %747 = vmatpush1.bf16.msra.mxu0 0
      %748 = vmatprep.subr.bf16.mxu0 0
      %749 = vmatpush1.bf16.msra.mxu0 0
      %750 = vmatprep.subr.bf16.mxu0 0
      %751 = vmatpush1.bf16.msra.mxu0 0
      %752 = vmatprep.subr.bf16.mxu0 0
      %753 = vmatpush1.bf16.msra.mxu0 0
      %754 = vmatprep.mubr.bf16.mxu0 0
      %755 = vmatmul.mubr.bf16.gmra.mrb[0].mxu0 %v696
      %v756 = vpop.f32.mrb[0].mxu0
      %v757 = vadd.f32 %v593, %v756
      %v758 = vpop.f32.mrb[0].mxu0
      %v759 = vpop.f32.mrb[0].mxu0
      %v760 = vadd.f32 %v596, %v759
      %v761 = vpop.f32.mrb[0].mxu0
      %762 = vmatprep.mubr.bf16.mxu0 0
      %763 = vmatmul.mubr.bf16.gmra.mrb[0].mxu0 %v699
      %v764 = vpop.f32.mrb[0].mxu0
      %v765 = vadd.f32 %v601, %v764
      %v766 = vpop.f32.mrb[0].mxu0
      %v767 = vpop.f32.mrb[0].mxu0
      %v768 = vadd.f32 %v604, %v767
      %v769 = vpop.f32.mrb[0].mxu0
      %770 = vmatprep.mubr.bf16.mxu0 0
      %771 = vmatmul.mubr.bf16.gmra.mrb[0].mxu0 %v702
      %v772 = vpop.f32.mrb[0].mxu0
      %v773 = vadd.f32 %v609, %v772
      %v774 = vpop.f32.mrb[0].mxu0
      %v775 = vpop.f32.mrb[0].mxu0
      %v776 = vadd.f32 %v612, %v775
      %v777 = vpop.f32.mrb[0].mxu0
      %778 = vmatprep.mubr.bf16.mxu0 0
      %779 = vmatmul.mubr.bf16.gmra.mrb[0].mxu0 %v705
      %v780 = vpop.f32.mrb[0].mxu0
      %v781 = vadd.f32 %v617, %v780
      %v782 = vpop.f32.mrb[0].mxu0
      %v783 = vpop.f32.mrb[0].mxu0
      %v784 = vadd.f32 %v620, %v783
      %v785 = vpop.f32.mrb[0].mxu0
      %786 = vmatprep.mubr.bf16.mxu0 0
      %787 = vmatmul.mubr.bf16.gmra.mrb[0].mxu0 %v708
      %v788 = vpop.f32.mrb[0].mxu0
      %v789 = vadd.f32 %v625, %v788
      %v790 = vpop.f32.mrb[0].mxu0
      %v791 = vpop.f32.mrb[0].mxu0
      %v792 = vadd.f32 %v628, %v791
      %v793 = vpop.f32.mrb[0].mxu0
      %794 = vmatprep.mubr.bf16.mxu0 0
      %795 = vmatmul.mubr.bf16.gmra.mrb[0].mxu0 %v711
      %v796 = vpop.f32.mrb[0].mxu0
      %v797 = vadd.f32 %v633, %v796
      %v798 = vpop.f32.mrb[0].mxu0
      %v799 = vpop.f32.mrb[0].mxu0
      %v800 = vadd.f32 %v636, %v799
      %v801 = vpop.f32.mrb[0].mxu0
      %802 = vmatprep.mubr.bf16.mxu0 0
      %803 = vmatmul.mubr.bf16.gmra.mrb[0].mxu0 %v714
      %v804 = vpop.f32.mrb[0].mxu0
      %v805 = vadd.f32 %v641, %v804
      %v806 = vpop.f32.mrb[0].mxu0
      %v807 = vpop.f32.mrb[0].mxu0
      %v808 = vadd.f32 %v644, %v807
      %v809 = vpop.f32.mrb[0].mxu0
      %810 = vmatprep.mubr.bf16.mxu0 0
      %811 = vmatmul.mubr.bf16.gmra.mrb[0].mxu0 %v717
      %v812 = vpop.f32.mrb[0].mxu0
      %v813 = vadd.f32 %v649, %v812
      %v814 = vpop.f32.mrb[0].mxu0
      %v815 = vpop.f32.mrb[0].mxu0
      %v816 = vadd.f32 %v652, %v815
      %v817 = vpop.f32.mrb[0].mxu0
      %818 = vdwg.mxu0
      %s819 = scalar_lea.vmem %s1, 4
      %v820 = vld [vmem:[%s819] sm:$0x3]
      %v823 = vunpack.c.l.b16 %v280
      %v824 = vunpack.c.l.b16 %v281
      %v825 = vpack.c.b16 %v824, %v823
      %v827 = vsel %vm529, %v825, 0
      %v830 = vsel %vm554, %v820, 0
      %832 = vmatprep.subr.bf16.mxu0 0
      %833 = vmatpush1.bf16.msra.mxu0 %v830
      %834 = vmatprep.subr.bf16.mxu0 0
      %835 = vmatpush1.bf16.msra.mxu0 0
      %836 = vmatprep.subr.bf16.mxu0 0
      %837 = vmatpush1.bf16.msra.mxu0 0
      %838 = vmatprep.subr.bf16.mxu0 0
      %839 = vmatpush1.bf16.msra.mxu0 0
      %840 = vmatprep.subr.bf16.mxu0 0
      %841 = vmatpush1.bf16.msra.mxu0 0
      %842 = vmatprep.subr.bf16.mxu0 0
      %843 = vmatpush1.bf16.msra.mxu0 0
      %844 = vmatprep.subr.bf16.mxu0 0
      %845 = vmatpush1.bf16.msra.mxu0 0
      %846 = vmatprep.subr.bf16.mxu0 0
      %847 = vmatpush1.bf16.msra.mxu0 0
      %848 = vmatprep.subr.bf16.mxu0 0
      %849 = vmatpush1.bf16.msra.mxu0 0
      %850 = vmatprep.subr.bf16.mxu0 0
      %851 = vmatpush1.bf16.msra.mxu0 0
      %852 = vmatprep.subr.bf16.mxu0 0
      %853 = vmatpush1.bf16.msra.mxu0 0
      %854 = vmatprep.subr.bf16.mxu0 0
      %855 = vmatpush1.bf16.msra.mxu0 0
      %856 = vmatprep.subr.bf16.mxu0 0
      %857 = vmatpush1.bf16.msra.mxu0 0
      %858 = vmatprep.subr.bf16.mxu0 0
      %859 = vmatpush1.bf16.msra.mxu0 0
      %860 = vmatprep.subr.bf16.mxu0 0
      %861 = vmatpush1.bf16.msra.mxu0 0
      %862 = vmatprep.subr.bf16.mxu0 0
      %863 = vmatpush1.bf16.msra.mxu0 0
      %864 = vmatprep.mubr.bf16.mxu0 0
      %865 = vmatmul.mubr.bf16.gmra.mrb[0].mxu0 %v699
      %v866 = vpop.f32.mrb[0].mxu0
      %v867 = vadd.f32 0.0, %v866
      %v868 = vpop.f32.mrb[0].mxu0
      %v869 = vpop.f32.mrb[0].mxu0
      %v870 = vadd.f32 0.0, %v869
      %v871 = vpop.f32.mrb[0].mxu0
      %872 = vmatprep.mubr.bf16.mxu0 0
      %873 = vmatmul.mubr.bf16.gmra.mrb[0].mxu0 %v702
      %v874 = vpop.f32.mrb[0].mxu0
      %v875 = vadd.f32 0.0, %v874
      %v876 = vpop.f32.mrb[0].mxu0
      %v877 = vpop.f32.mrb[0].mxu0
      %v878 = vadd.f32 0.0, %v877
      %v879 = vpop.f32.mrb[0].mxu0
      %880 = vmatprep.mubr.bf16.mxu0 0
      %881 = vmatmul.mubr.bf16.gmra.mrb[0].mxu0 %v705
      %v882 = vpop.f32.mrb[0].mxu0
      %v883 = vadd.f32 0.0, %v882
      %v884 = vpop.f32.mrb[0].mxu0
      %v885 = vpop.f32.mrb[0].mxu0
      %v886 = vadd.f32 0.0, %v885
      %v887 = vpop.f32.mrb[0].mxu0
      %888 = vmatprep.mubr.bf16.mxu0 0
      %889 = vmatmul.mubr.bf16.gmra.mrb[0].mxu0 %v708
      %v890 = vpop.f32.mrb[0].mxu0
      %v891 = vadd.f32 0.0, %v890
      %v892 = vpop.f32.mrb[0].mxu0
      %v893 = vpop.f32.mrb[0].mxu0
      %v894 = vadd.f32 0.0, %v893
      %v895 = vpop.f32.mrb[0].mxu0
      %896 = vmatprep.mubr.bf16.mxu0 0
      %897 = vmatmul.mubr.bf16.gmra.mrb[0].mxu0 %v711
      %v898 = vpop.f32.mrb[0].mxu0
      %v899 = vadd.f32 0.0, %v898
      %v900 = vpop.f32.mrb[0].mxu0
      %v901 = vpop.f32.mrb[0].mxu0
      %v902 = vadd.f32 0.0, %v901
      %v903 = vpop.f32.mrb[0].mxu0
      %904 = vmatprep.mubr.bf16.mxu0 0
      %905 = vmatmul.mubr.bf16.gmra.mrb[0].mxu0 %v714
      %v906 = vpop.f32.mrb[0].mxu0
      %v907 = vadd.f32 0.0, %v906
      %v908 = vpop.f32.mrb[0].mxu0
      %v909 = vpop.f32.mrb[0].mxu0
      %v910 = vadd.f32 0.0, %v909
      %v911 = vpop.f32.mrb[0].mxu0
      %912 = vmatprep.mubr.bf16.mxu0 0
      %913 = vmatmul.mubr.bf16.gmra.mrb[0].mxu0 %v717
      %v914 = vpop.f32.mrb[0].mxu0
      %v915 = vadd.f32 0.0, %v914
      %v916 = vpop.f32.mrb[0].mxu0
      %v917 = vpop.f32.mrb[0].mxu0
      %v918 = vadd.f32 0.0, %v917
      %v919 = vpop.f32.mrb[0].mxu0
      %920 = vmatprep.mubr.bf16.mxu0 0
      %921 = vmatmul.mubr.bf16.gmra.mrb[0].mxu0 %v827
      %v922 = vpop.f32.mrb[0].mxu0
      %v923 = vadd.f32 0.0, %v922
      %v924 = vpop.f32.mrb[0].mxu0
      %v925 = vpop.f32.mrb[0].mxu0
      %v926 = vadd.f32 0.0, %v925
      %v927 = vpop.f32.mrb[0].mxu0
      %928 = vdwg.mxu0
      %v929 = vadd.f32 %v757, %v867
      %v930 = vadd.f32 %v760, %v870
      %v931 = vadd.f32 %v765, %v875
      %v932 = vadd.f32 %v768, %v878
      %v933 = vadd.f32 %v773, %v883
      %v934 = vadd.f32 %v776, %v886
      %v935 = vadd.f32 %v781, %v891
      %v936 = vadd.f32 %v784, %v894
      %v937 = vadd.f32 %v789, %v899
      %v938 = vadd.f32 %v792, %v902
      %v939 = vadd.f32 %v797, %v907
      %v940 = vadd.f32 %v800, %v910
      %v941 = vadd.f32 %v805, %v915
      %v942 = vadd.f32 %v808, %v918
      %v943 = vadd.f32 %v813, %v923
      %v944 = vadd.f32 %v816, %v926
      %s945 = scalar_lea.vmem %s1, 6
      %v946 = vld [vmem:[%s945] sm:$0x3]
      %v947 = vunpack.c.l.b16 %v491
      %v948 = vunpack.c.l.b16 %v501
      %v949 = vpack.c.b16 %v948, %v947
      %v951 = vsel %vm529, %v949, 0
      %v954 = vsel %vm554, %v946, 0
      %956 = vmatprep.subr.bf16.mxu0 0
      %957 = vmatpush1.bf16.msra.mxu0 %v954
      %958 = vmatprep.subr.bf16.mxu0 0
      %959 = vmatpush1.bf16.msra.mxu0 0
      %960 = vmatprep.subr.bf16.mxu0 0
      %961 = vmatpush1.bf16.msra.mxu0 0
      %962 = vmatprep.subr.bf16.mxu0 0
      %963 = vmatpush1.bf16.msra.mxu0 0
      %964 = vmatprep.subr.bf16.mxu0 0
      %965 = vmatpush1.bf16.msra.mxu0 0
      %966 = vmatprep.subr.bf16.mxu0 0
      %967 = vmatpush1.bf16.msra.mxu0 0
      %968 = vmatprep.subr.bf16.mxu0 0
      %969 = vmatpush1.bf16.msra.mxu0 0
      %970 = vmatprep.subr.bf16.mxu0 0
      %971 = vmatpush1.bf16.msra.mxu0 0
      %972 = vmatprep.subr.bf16.mxu0 0
      %973 = vmatpush1.bf16.msra.mxu0 0
      %974 = vmatprep.subr.bf16.mxu0 0
      %975 = vmatpush1.bf16.msra.mxu0 0
      %976 = vmatprep.subr.bf16.mxu0 0
      %977 = vmatpush1.bf16.msra.mxu0 0
      %978 = vmatprep.subr.bf16.mxu0 0
      %979 = vmatpush1.bf16.msra.mxu0 0
      %980 = vmatprep.subr.bf16.mxu0 0
      %981 = vmatpush1.bf16.msra.mxu0 0
      %982 = vmatprep.subr.bf16.mxu0 0
      %983 = vmatpush1.bf16.msra.mxu0 0
      %984 = vmatprep.subr.bf16.mxu0 0
      %985 = vmatpush1.bf16.msra.mxu0 0
      %986 = vmatprep.subr.bf16.mxu0 0
      %987 = vmatpush1.bf16.msra.mxu0 0
      %988 = vmatprep.mubr.bf16.mxu0 0
      %989 = vmatmul.mubr.bf16.gmra.mrb[0].mxu0 %v534
      %v990 = vpop.f32.mrb[0].mxu0
      %v991 = vadd.f32 0.0, %v990
      %v992 = vpop.f32.mrb[0].mxu0
      %v993 = vpop.f32.mrb[0].mxu0
      %v994 = vadd.f32 0.0, %v993
      %v995 = vpop.f32.mrb[0].mxu0
      %996 = vmatprep.mubr.bf16.mxu0 0
      %997 = vmatmul.mubr.bf16.gmra.mrb[0].mxu0 %v537
      %v998 = vpop.f32.mrb[0].mxu0
      %v999 = vadd.f32 0.0, %v998
      %v1000 = vpop.f32.mrb[0].mxu0
      %v1001 = vpop.f32.mrb[0].mxu0
      %v1002 = vadd.f32 0.0, %v1001
      %v1003 = vpop.f32.mrb[0].mxu0
      %1004 = vmatprep.mubr.bf16.mxu0 0
      %1005 = vmatmul.mubr.bf16.gmra.mrb[0].mxu0 %v540
      %v1006 = vpop.f32.mrb[0].mxu0
      %v1007 = vadd.f32 0.0, %v1006
      %v1008 = vpop.f32.mrb[0].mxu0
      %v1009 = vpop.f32.mrb[0].mxu0
      %v1010 = vadd.f32 0.0, %v1009
      %v1011 = vpop.f32.mrb[0].mxu0
      %1012 = vmatprep.mubr.bf16.mxu0 0
      %1013 = vmatmul.mubr.bf16.gmra.mrb[0].mxu0 %v543
      %v1014 = vpop.f32.mrb[0].mxu0
      %v1015 = vadd.f32 0.0, %v1014
      %v1016 = vpop.f32.mrb[0].mxu0
      %v1017 = vpop.f32.mrb[0].mxu0
      %v1018 = vadd.f32 0.0, %v1017
      %v1019 = vpop.f32.mrb[0].mxu0
      %1020 = vmatprep.mubr.bf16.mxu0 0
      %1021 = vmatmul.mubr.bf16.gmra.mrb[0].mxu0 %v546
      %v1022 = vpop.f32.mrb[0].mxu0
      %v1023 = vadd.f32 0.0, %v1022
      %v1024 = vpop.f32.mrb[0].mxu0
      %v1025 = vpop.f32.mrb[0].mxu0
      %v1026 = vadd.f32 0.0, %v1025
      %v1027 = vpop.f32.mrb[0].mxu0
      %1028 = vmatprep.mubr.bf16.mxu0 0
      %1029 = vmatmul.mubr.bf16.gmra.mrb[0].mxu0 %v549
      %v1030 = vpop.f32.mrb[0].mxu0
      %v1031 = vadd.f32 0.0, %v1030
      %v1032 = vpop.f32.mrb[0].mxu0
      %v1033 = vpop.f32.mrb[0].mxu0
      %v1034 = vadd.f32 0.0, %v1033
      %v1035 = vpop.f32.mrb[0].mxu0
      %1036 = vmatprep.mubr.bf16.mxu0 0
      %1037 = vmatmul.mubr.bf16.gmra.mrb[0].mxu0 %v552
      %v1038 = vpop.f32.mrb[0].mxu0
      %v1039 = vadd.f32 0.0, %v1038
      %v1040 = vpop.f32.mrb[0].mxu0
      %v1041 = vpop.f32.mrb[0].mxu0
      %v1042 = vadd.f32 0.0, %v1041
      %v1043 = vpop.f32.mrb[0].mxu0
      %1044 = vmatprep.mubr.bf16.mxu0 0
      %1045 = vmatmul.mubr.bf16.gmra.mrb[0].mxu0 %v951
      %v1046 = vpop.f32.mrb[0].mxu0
      %v1047 = vadd.f32 0.0, %v1046
      %v1048 = vpop.f32.mrb[0].mxu0
      %v1049 = vpop.f32.mrb[0].mxu0
      %v1050 = vadd.f32 0.0, %v1049
      %v1051 = vpop.f32.mrb[0].mxu0
      %1052 = vdwg.mxu0
      %v1053 = vadd.f32 %v929, %v991
      %v1054 = vadd.f32 %v930, %v994
      %v1055 = vadd.f32 %v931, %v999
      %v1056 = vadd.f32 %v932, %v1002
      %v1057 = vadd.f32 %v933, %v1007
      %v1058 = vadd.f32 %v934, %v1010
      %v1059 = vadd.f32 %v935, %v1015
      %v1060 = vadd.f32 %v936, %v1018
      %v1061 = vadd.f32 %v937, %v1023
      %v1062 = vadd.f32 %v938, %v1026
      %v1063 = vadd.f32 %v939, %v1031
      %v1064 = vadd.f32 %v940, %v1034
      %v1065 = vadd.f32 %v941, %v1039
      %v1066 = vadd.f32 %v942, %v1042
      %v1067 = vadd.f32 %v943, %v1047
      %v1068 = vadd.f32 %v944, %v1050
      %v1069 = vld [vmem:[%s2] sm:$0x1]
      %v1071 = vlaneseq
      %v1072 = vshrl.u32 %v1071, 7
      %v1073 = vsub.s32 0, %v1072
      %v1074 = vrot.slane %v1069, %v1073
      %v1076 = vadd.f32 %v1053, %v1074
      %v1077 = vadd.f32 %v1054, %v1074
      %v1078 = vadd.f32 %v1055, %v1074
      %v1079 = vadd.f32 %v1056, %v1074
      %v1080 = vadd.f32 %v1057, %v1074
      %v1081 = vadd.f32 %v1058, %v1074
      %v1082 = vadd.f32 %v1059, %v1074
      %v1083 = vadd.f32 %v1060, %v1074
      %v1084 = vadd.f32 %v1061, %v1074
      %v1085 = vadd.f32 %v1062, %v1074
      %v1086 = vadd.f32 %v1063, %v1074
      %v1087 = vadd.f32 %v1064, %v1074
      %v1088 = vadd.f32 %v1065, %v1074
      %v1089 = vadd.f32 %v1066, %v1074
      %v1090 = vadd.f32 %v1067, %v1074
      %v1091 = vadd.f32 %v1068, %v1074
      %vm1092 = vcmask 523264
      %1093 = vst.msk [vmem:[%s246] sm:$0xff] %vm1092, %v1076
      %1094 = vst.msk [vmem:[%s246 + $0x8] sm:$0xff] %vm1092, %v1077
      %1095 = vst.msk [vmem:[%s246 + $0x10] sm:$0xff] %vm1092, %v1078
      %1096 = vst.msk [vmem:[%s246 + $0x18] sm:$0xff] %vm1092, %v1079
      %1097 = vst.msk [vmem:[%s246 + $0x20] sm:$0xff] %vm1092, %v1080
      %1098 = vst.msk [vmem:[%s246 + $0x28] sm:$0xff] %vm1092, %v1081
      %1099 = vst.msk [vmem:[%s246 + $0x30] sm:$0xff] %vm1092, %v1082
      %1100 = vst.msk [vmem:[%s246 + $0x38] sm:$0xff] %vm1092, %v1083
      %1101 = vst.msk [vmem:[%s246 + $0x40] sm:$0xff] %vm1092, %v1084
      %1102 = vst.msk [vmem:[%s246 + $0x48] sm:$0xff] %vm1092, %v1085
      %1103 = vst.msk [vmem:[%s246 + $0x50] sm:$0xff] %vm1092, %v1086
      %1104 = vst.msk [vmem:[%s246 + $0x58] sm:$0xff] %vm1092, %v1087
      %1105 = vst.msk [vmem:[%s246 + $0x60] sm:$0xff] %vm1092, %v1088
      %1106 = vst.msk [vmem:[%s246 + $0x68] sm:$0xff] %vm1092, %v1089
      %1107 = vst.msk [vmem:[%s246 + $0x70] sm:$0xff] %vm1092, %v1090
      %1108 = vst.msk [vmem:[%s246 + $0x78] sm:$0xff] %vm1092, %v1091
      %v1109 = vsel %vm1092, %v1076, 0.0
      %v1110 = vsel %vm1092, %v1077, 0.0
      %v1111 = vadd.f32 %v1109, %v1110
      %v1112 = vsel %vm1092, %v1078, 0.0
      %v1113 = vadd.f32 %v1111, %v1112
      %v1114 = vsel %vm1092, %v1079, 0.0
      %v1115 = vadd.f32 %v1113, %v1114
      %v1116 = vsel %vm1092, %v1080, 0.0
      %v1117 = vadd.f32 %v1115, %v1116
      %v1118 = vsel %vm1092, %v1081, 0.0
      %v1119 = vadd.f32 %v1117, %v1118
      %v1120 = vsel %vm1092, %v1082, 0.0
      %v1121 = vadd.f32 %v1119, %v1120
      %v1122 = vsel %vm1092, %v1083, 0.0
      %v1123 = vadd.f32 %v1121, %v1122
      %v1124 = vsel %vm1092, %v1084, 0.0
      %v1125 = vadd.f32 %v1123, %v1124
      %v1126 = vsel %vm1092, %v1085, 0.0
      %v1127 = vadd.f32 %v1125, %v1126
      %v1128 = vsel %vm1092, %v1086, 0.0
      %v1129 = vadd.f32 %v1127, %v1128
      %v1130 = vsel %vm1092, %v1087, 0.0
      %v1131 = vadd.f32 %v1129, %v1130
      %v1132 = vsel %vm1092, %v1088, 0.0
      %v1133 = vadd.f32 %v1131, %v1132
      %v1134 = vsel %vm1092, %v1089, 0.0
      %v1135 = vadd.f32 %v1133, %v1134
      %v1136 = vsel %vm1092, %v1090, 0.0
      %v1137 = vadd.f32 %v1135, %v1136
      %v1138 = vsel %vm1092, %v1091, 0.0
      %v1139 = vadd.f32 %v1137, %v1138
      %v1140 = vrot.slane %v1139, 4
      %v1141 = vadd.f32 %v1139, %v1140
      %v1142 = vrot.slane %v1141, 2
      %v1143 = vadd.f32 %v1141, %v1142
      %v1144 = vrot.slane %v1143, 1
      %v1145 = vadd.f32 %v1143, %v1144
      %v1146 = vmul.f32 %v1076, %v1076
      %v1147 = vmul.f32 %v1077, %v1077
      %v1148 = vmul.f32 %v1078, %v1078
      %v1149 = vmul.f32 %v1079, %v1079
      %v1150 = vmul.f32 %v1080, %v1080
      %v1151 = vmul.f32 %v1081, %v1081
      %v1152 = vmul.f32 %v1082, %v1082
      %v1153 = vmul.f32 %v1083, %v1083
      %v1154 = vmul.f32 %v1084, %v1084
      %v1155 = vmul.f32 %v1085, %v1085
      %v1156 = vmul.f32 %v1086, %v1086
      %v1157 = vmul.f32 %v1087, %v1087
      %v1158 = vmul.f32 %v1088, %v1088
      %v1159 = vmul.f32 %v1089, %v1089
      %v1160 = vmul.f32 %v1090, %v1090
      %v1161 = vmul.f32 %v1091, %v1091
      %v1162 = vsel %vm1092, %v1146, 0.0
      %v1163 = vsel %vm1092, %v1147, 0.0
      %v1164 = vadd.f32 %v1162, %v1163
      %v1165 = vsel %vm1092, %v1148, 0.0
      %v1166 = vadd.f32 %v1164, %v1165
      %v1167 = vsel %vm1092, %v1149, 0.0
      %v1168 = vadd.f32 %v1166, %v1167
      %v1169 = vsel %vm1092, %v1150, 0.0
      %v1170 = vadd.f32 %v1168, %v1169
      %v1171 = vsel %vm1092, %v1151, 0.0
      %v1172 = vadd.f32 %v1170, %v1171
      %v1173 = vsel %vm1092, %v1152, 0.0
      %v1174 = vadd.f32 %v1172, %v1173
      %v1175 = vsel %vm1092, %v1153, 0.0
      %v1176 = vadd.f32 %v1174, %v1175
      %v1177 = vsel %vm1092, %v1154, 0.0
      %v1178 = vadd.f32 %v1176, %v1177
      %v1179 = vsel %vm1092, %v1155, 0.0
      %v1180 = vadd.f32 %v1178, %v1179
      %v1181 = vsel %vm1092, %v1156, 0.0
      %v1182 = vadd.f32 %v1180, %v1181
      %v1183 = vsel %vm1092, %v1157, 0.0
      %v1184 = vadd.f32 %v1182, %v1183
      %v1185 = vsel %vm1092, %v1158, 0.0
      %v1186 = vadd.f32 %v1184, %v1185
      %v1187 = vsel %vm1092, %v1159, 0.0
      %v1188 = vadd.f32 %v1186, %v1187
      %v1189 = vsel %vm1092, %v1160, 0.0
      %v1190 = vadd.f32 %v1188, %v1189
      %v1191 = vsel %vm1092, %v1161, 0.0
      %v1192 = vadd.f32 %v1190, %v1191
      %v1193 = vrot.slane %v1192, 4
      %v1194 = vadd.f32 %v1192, %v1193
      %v1195 = vrot.slane %v1194, 2
      %v1196 = vadd.f32 %v1194, %v1195
      %v1197 = vrot.slane %v1196, 1
      %v1198 = vadd.f32 %v1196, %v1197
      %vm1199 = vcmask 1040384
      %v1200 = vsel %vm1199, %v1145, %v1198
      %vm1201 = vcmask 517120
      %1202 = vst.msk [vmem:[%s254] sm:$0x3] %vm1201, %v1200
      %p1203 = scmp.lt.s32.totalorder %s20, 1
      %s1204 = scalar_select %p1203, %s20, 1
      %p1205 = scmp.lt.s32.totalorder %s21, 1
      %s1206 = scalar_select %p1205, %s21, 1
      %s1207 = smul.addr %s1206, 16
      %s1208 = smul.addr %s1204, 32
      %s1209 = sadd.s32 %s1207, %s1208
      %s1210 = smul.addr %s1209, 8
      %s1211 = scalar_lea.vmem %s3, %s1210
      %p1212 = scmp.lt.s32.totalorder %s20, 1
      %s1213 = scalar_select %p1212, %s20, 1
      %p1214 = scmp.lt.s32.totalorder %s21, 1
      %s1215 = scalar_select %p1214, %s21, 1
      %s1216 = smul.addr %s1213, 2
      %s1217 = sadd.s32 %s1215, %s1216
      %s1218 = smul.addr %s1217, 2
      %s1219 = scalar_lea.vmem %s4, %s1218
      // Predicated region
      $region33: #{upsampler_block.2} parent=31 // pred_check
        %p1220 = pneg %p118
      $region34: #{upsampler_block.2} parent=31 // pred_check_branch
        %1222 = sbr.rel (%p1220) target = $region36
      $region35: #{upsampler_block.2} parent=31 // pred_region
        _
      $region36: #{upsampler_block.2} parent=31 // pred_fallthru
        _
      // Predicated region
      $region37: #{upsampler_block.2} parent=31 // pred_check
        %p1223 = pneg %p146
      $region38: #{upsampler_block.2} parent=31 // pred_check_branch
        %1225 = sbr.rel (%p1223) target = $region40
      $region39: #{upsampler_block.2} parent=31 // pred_region
        _
      $region40: #{upsampler_block.2} parent=31 // pred_fallthru
        _
    $region32: #{upsampler_block.2} parent=5 // pred_fallthru
      _
    %p1226 = scmp.le.s32.totalorder 2, %s11
    // Predicated region
    $region41: #{upsampler_block.2} parent=5 // pred_check
      %p1227 = pneg %p1226
    $region42: #{upsampler_block.2} parent=5 // pred_check_branch
      %1229 = sbr.rel (%p1227) target = $region44
    $region43: #{upsampler_block.2} parent=5 // pred_region
      %s1230 = ssub.s32 %s11, 2
      // Predicated region
      $region45: #{upsampler_block.2} parent=43 // pred_check
        %p1231 = pneg %p124
      $region46: #{upsampler_block.2} parent=43 // pred_check_branch
        %1233 = sbr.rel (%p1231) target = $region48
      $region47: #{upsampler_block.2} parent=43 // pred_region
        %p1234 = scmp.lt.s32.totalorder %s22, 1
        %s1235 = scalar_select %p1234, %s22, 1
        %p1236 = scmp.lt.s32.totalorder %s23, 1
        %s1237 = scalar_select %p1236, %s23, 1
        %s1238 = smul.addr %s1237, 16
        %s1239 = smul.addr %s1235, 32
        %s1240 = sadd.s32 %s1238, %s1239
        %s1241 = smul.addr %s1240, 8
        %s1242 = scalar_lea.vmem %s3, %s1241
      $region48: #{upsampler_block.2} parent=43 // pred_fallthru
        _
      // Predicated region
      $region49: #{upsampler_block.2} parent=43 // pred_check
        %p1243 = pneg %p152
      $region50: #{upsampler_block.2} parent=43 // pred_check_branch
        %1245 = sbr.rel (%p1243) target = $region52
      $region51: #{upsampler_block.2} parent=43 // pred_region
        %p1246 = scmp.lt.s32.totalorder %s22, 1
        %s1247 = scalar_select %p1246, %s22, 1
        %p1248 = scmp.lt.s32.totalorder %s23, 1
        %s1249 = scalar_select %p1248, %s23, 1
        %s1250 = smul.addr %s1247, 2
        %s1251 = sadd.s32 %s1249, %s1250
        %s1252 = smul.addr %s1251, 2
        %s1253 = scalar_lea.vmem %s4, %s1252
      $region52: #{upsampler_block.2} parent=43 // pred_fallthru
        _
    $region44: #{upsampler_block.2} parent=5 // pred_fallthru
      _
  $region6: #{upsampler_block.2} parent=0 // loop_footer
    %s15 = sadd.s32 1, %s11
  $region7: #{upsampler_block.2} parent=0 // loop_footer_branch
    %10 = sbr.rel target = $region3
  $region8: #{upsampler_block.2} parent=0 // loop_exit
    _

</llo_original>
